<compile_context>
chip_gen: v7x
topology: tpu7x:2x2x1
jax: 0.10.0
libtpu: 0.0.40
codegen_flags: <defaults>
</compile_context>

<pallas_src>
import functools

import jax
import jax.numpy as jnp
from jax.experimental import pallas as pl
from jax.experimental.pallas import tpu as pltpu


_LANE = 128      # TPU lane width: output last dim is padded to a multiple of this
_SUBLANE = 8     # batch tiles must be a multiple of the sublane count


def _round_up(x, m):
    return (x + m - 1) // m * m


def _generator_kernel(noise_ref, ent_ref, w1n_ref, w1e_ref, b1_ref, w2_ref,
                      b2_ref, o_ref):
    """Fused generator MLP for one batch tile.

    h   = leaky_relu(noise @ W1[:noise_dim] + ent @ W1[noise_dim:] + b1)
    out = h @ W2 + b2

    The torch.cat((noise, ent), -1) is folded into a split contraction so the
    concatenated activation never round-trips through HBM.
    """
    # First linear layer: two MXU dots (split contraction), f32 accumulation.
    h = jnp.dot(noise_ref[...], w1n_ref[...], preferred_element_type=jnp.float32)
    h = h + jnp.dot(ent_ref[...], w1e_ref[...], preferred_element_type=jnp.float32)
    h = h + b1_ref[...].astype(jnp.float32)

    # LeakyReLU (PyTorch default negative_slope = 0.01), VPU elementwise.
    h = jnp.where(h > 0, h, jnp.float32(0.01) * h)

    # Second linear layer: feed the MXU in the weight dtype (bf16 fast path when
    # the weights are bf16), accumulate in f32.
    out = jnp.dot(h.astype(w2_ref.dtype), w2_ref[...],
                  preferred_element_type=jnp.float32)
    out = out + b2_ref[...].astype(jnp.float32)
    o_ref[...] = out.astype(o_ref.dtype)


@functools.partial(jax.jit, static_argnames=("batch_tile",))
def base_generator_forward(batch_ent_emb, noise, w1_noise, w1_ent, b1, w2, b2,
                           *, batch_tile=256):
    """JAX wrapper reproducing BaseGenerator.forward.

    batch_ent_emb: (B, structure_dim)
    noise        : (B, noise_dim)      -- passed in so the run is deterministic
    w1_noise     : (noise_dim, 512)    -- first noise_dim rows of W1
    w1_ent       : (structure_dim, 512)-- remaining rows of W1
    b1           : (1, 512)
    w2           : (512, img_dim)
    b2           : (1, img_dim)
    batch_tile   : rows per grid step (multiple of 8; 128-512 recommended).
    """
    batch, structure_dim = batch_ent_emb.shape
    _, noise_dim = noise.shape
    proj_dim = w1_noise.shape[1]
    img_dim = w2.shape[1]
    out_dtype = batch_ent_emb.dtype

    # --- batch tiling: large tiles keep the MXU full; pad B so it divides evenly.
    assert batch_tile % _SUBLANE == 0, "batch_tile must be a multiple of 8"
    tb = min(batch_tile, _round_up(batch, _SUBLANE))
    batch_pad = _round_up(batch, tb)
    if batch_pad != batch:
        pad_rows = batch_pad - batch
        noise = jnp.pad(noise, ((0, pad_rows), (0, 0)))
        batch_ent_emb = jnp.pad(batch_ent_emb, ((0, pad_rows), (0, 0)))

    # --- lane-dense output: pad img_dim (W2 / b2 columns) to a multiple of 128
    # so every output store is an unmasked full-lane vst; padding is sliced off
    # below.  (In production, pad the weights once at init instead of per call.)
    img_pad = _round_up(img_dim, _LANE)
    if img_pad != img_dim:
        w2 = jnp.pad(w2, ((0, 0), (0, img_pad - img_dim)))
        b2 = jnp.pad(b2, ((0, 0), (0, img_pad - img_dim)))

    grid = (batch_pad // tb,)

    # VMEM budget (per step, double-buffered activations): weights stay resident
    # (W1 + W2 + biases), activation DMA is only (tb, noise+struct) in and
    # (tb, img_pad) out — comfortably under the 32 MiB scoped default for the
    # sizes this module uses.  Set vmem_limit_bytes here if img_dim grows large.
    out = pl.pallas_call(
        _generator_kernel,
        out_shape=jax.ShapeDtypeStruct((batch_pad, img_pad), out_dtype),
        grid_spec=pltpu.PrefetchScalarGridSpec(
            num_scalar_prefetch=0,
            grid=grid,
            in_specs=[
                # Activations: tiled over the batch (the only per-step DMA).
                pl.BlockSpec((tb, noise_dim), lambda i: (i, 0)),
                pl.BlockSpec((tb, structure_dim), lambda i: (i, 0)),
                # Weights / biases: full block, constant index -> VMEM-resident
                # across the whole grid.
                pl.BlockSpec((noise_dim, proj_dim), lambda i: (0, 0)),
                pl.BlockSpec((structure_dim, proj_dim), lambda i: (0, 0)),
                pl.BlockSpec((1, proj_dim), lambda i: (0, 0)),
                pl.BlockSpec((proj_dim, img_pad), lambda i: (0, 0)),
                pl.BlockSpec((1, img_pad), lambda i: (0, 0)),
            ],
            out_specs=pl.BlockSpec((tb, img_pad), lambda i: (i, 0)),
        ),
        compiler_params=pltpu.CompilerParams(
            # Batch axis is fully parallel -> megacore-shardable on v7x when the
            # grid has >= 2 steps.
            dimension_semantics=("parallel",),
        ),
    )(noise, batch_ent_emb, w1_noise, w1_ent, b1, w2, b2)

    # Strip batch / lane padding.
    return out[:batch, :img_dim]


def init_params(key, noise_dim, structure_dim, img_dim, proj_dim=512,
                dtype=jnp.float32):
    """Deterministic synthetic parameters matching nn.Linear shapes (transposed).

    W1 is returned pre-split along the input axis so the kernel can fold the
    torch.cat((noise, ent)) into two dots with no HBM concat.  Use
    dtype=jnp.bfloat16 for the fast bf16 MXU path on real workloads.
    """
    k1, k2, k3, k4 = jax.random.split(key, 4)
    in_dim = noise_dim + structure_dim
    lim1 = 1.0 / jnp.sqrt(in_dim)
    lim2 = 1.0 / jnp.sqrt(proj_dim)
    w1 = jax.random.uniform(k1, (in_dim, proj_dim), jnp.float32, -lim1, lim1)
    b1 = jax.random.uniform(k2, (1, proj_dim), jnp.float32, -lim1, lim1)
    w2 = jax.random.uniform(k3, (proj_dim, img_dim), jnp.float32, -lim2, lim2)
    b2 = jax.random.uniform(k4, (1, img_dim), jnp.float32, -lim2, lim2)
    w1_noise, w1_ent = w1[:noise_dim], w1[noise_dim:]
    return tuple(a.astype(dtype) for a in (w1_noise, w1_ent, b1, w2, b2))


if __name__ == "__main__":
    # Small but representative shapes: exercises batch padding (200 -> 256),
    # a multi-step parallel grid (2 steps of 128 rows), and lane padding of the
    # 100-wide output up to 128.
    noise_dim = 64
    structure_dim = 64
    img_dim = 100
    batch = 200

    key = jax.random.PRNGKey(0)
    kp, ke, kn = jax.random.split(key, 3)

    w1_noise, w1_ent, b1, w2, b2 = init_params(kp, noise_dim, structure_dim,
                                               img_dim, dtype=jnp.float32)
    batch_ent_emb = jax.random.normal(ke, (batch, structure_dim), jnp.float32)
    # torch.randn equivalent (generated outside the kernel so the run is
    # deterministic).  TODO(synk): could also draw in-kernel via pltpu.prng_*.
    noise = jax.random.normal(kn, (batch, noise_dim), jnp.float32)

    out = base_generator_forward(batch_ent_emb, noise, w1_noise, w1_ent,
                                 b1, w2, b2, batch_tile=128)
    out = jax.block_until_ready(out)

    # Pure-JAX reference check of the fused kernel.
    x = jnp.concatenate([noise, batch_ent_emb], axis=-1)
    w1_full = jnp.concatenate([w1_noise, w1_ent], axis=0)
    h = x @ w1_full + b1
    h = jnp.where(h > 0, h, 0.01 * h)
    ref = h @ w2 + b2
    assert out.shape == (batch, img_dim)
    assert jnp.allclose(out, ref, atol=1e-4, rtol=1e-4)

    print("KERNEL_OK")
</pallas_src>

<mosaic_0001>
module attributes {stable_mosaic.version = 11 : i64} {
  func.func @_generator_kernel(%arg0: i32, %arg1: memref<128x64xf32, #tpu.memory_space<vmem>>, %arg2: memref<128x64xf32, #tpu.memory_space<vmem>>, %arg3: memref<64x512xf32, #tpu.memory_space<vmem>>, %arg4: memref<64x512xf32, #tpu.memory_space<vmem>>, %arg5: memref<1x512xf32, #tpu.memory_space<vmem>>, %arg6: memref<512x128xf32, #tpu.memory_space<vmem>>, %arg7: memref<1x128xf32, #tpu.memory_space<vmem>>, %arg8: memref<128x128xf32, #tpu.memory_space<vmem>>) attributes {dimension_semantics = [#tpu.dimension_semantics<parallel>], iteration_bounds = array<i64: 2>, scalar_prefetch = 0 : i64, scratch_operands = 0 : i64, tpu.core_type = #tpu.core_type<tc>, window_params = [{transform_indices = @transform_0, window_bounds = array<i64: 128, 64>}, {transform_indices = @transform_1, window_bounds = array<i64: 128, 64>}, {pipeline_mode = #tpu.pipeline_mode<synchronous>, transform_indices = @transform_2, window_bounds = array<i64: 64, 512>}, {pipeline_mode = #tpu.pipeline_mode<synchronous>, transform_indices = @transform_3, window_bounds = array<i64: 64, 512>}, {pipeline_mode = #tpu.pipeline_mode<synchronous>, transform_indices = @transform_4, window_bounds = array<i64: 1, 512>}, {pipeline_mode = #tpu.pipeline_mode<synchronous>, transform_indices = @transform_5, window_bounds = array<i64: 512, 128>}, {pipeline_mode = #tpu.pipeline_mode<synchronous>, transform_indices = @transform_6, window_bounds = array<i64: 1, 128>}, {transform_indices = @transform_7, window_bounds = array<i64: 128, 128>}]} {
    %c0 = arith.constant 0 : index
    %c0_0 = arith.constant 0 : index
    %0 = vector.load %arg1[%c0, %c0_0] : memref<128x64xf32, #tpu.memory_space<vmem>>, vector<128x64xf32>
    %c0_1 = arith.constant 0 : index
    %c0_2 = arith.constant 0 : index
    %1 = vector.load %arg3[%c0_1, %c0_2] : memref<64x512xf32, #tpu.memory_space<vmem>>, vector<64x512xf32>
    %cst = arith.constant dense<0.000000e+00> : vector<128x512xf32>
    %2 = tpu.matmul %0, %1, %cst {dimension_numbers = #tpu.dot_dimension_numbers<[1], [0], [0], [1], [0, 0, 1, 1], [], []>} : vector<128x64xf32>, vector<64x512xf32>, vector<128x512xf32> -> vector<128x512xf32>
    %c0_3 = arith.constant 0 : index
    %c0_4 = arith.constant 0 : index
    %3 = vector.load %arg2[%c0_3, %c0_4] : memref<128x64xf32, #tpu.memory_space<vmem>>, vector<128x64xf32>
    %c0_5 = arith.constant 0 : index
    %c0_6 = arith.constant 0 : index
    %4 = vector.load %arg4[%c0_5, %c0_6] : memref<64x512xf32, #tpu.memory_space<vmem>>, vector<64x512xf32>
    %cst_7 = arith.constant dense<0.000000e+00> : vector<128x512xf32>
    %5 = tpu.matmul %3, %4, %cst_7 {dimension_numbers = #tpu.dot_dimension_numbers<[1], [0], [0], [1], [0, 0, 1, 1], [], []>} : vector<128x64xf32>, vector<64x512xf32>, vector<128x512xf32> -> vector<128x512xf32>
    %6 = arith.addf %2, %5 : vector<128x512xf32>
    %c0_8 = arith.constant 0 : index
    %c0_9 = arith.constant 0 : index
    %7 = vector.load %arg5[%c0_8, %c0_9] : memref<1x512xf32, #tpu.memory_space<vmem>>, vector<1x512xf32>
    %8 = vector.broadcast %7 : vector<1x512xf32> to vector<128x512xf32>
    %9 = arith.addf %6, %8 : vector<128x512xf32>
    %cst_10 = arith.constant 0.000000e+00 : f32
    %10 = vector.broadcast %cst_10 : f32 to vector<128x512xf32>
    %11 = arith.cmpf ogt, %9, %10 : vector<128x512xf32>
    %cst_11 = arith.constant 0.00999999977 : f32
    %12 = vector.broadcast %cst_11 : f32 to vector<128x512xf32>
    %13 = arith.mulf %12, %9 : vector<128x512xf32>
    %14 = arith.select %11, %9, %13 : vector<128x512xi1>, vector<128x512xf32>
    %c0_12 = arith.constant 0 : index
    %c0_13 = arith.constant 0 : index
    %15 = vector.load %arg6[%c0_12, %c0_13] : memref<512x128xf32, #tpu.memory_space<vmem>>, vector<512x128xf32>
    %cst_14 = arith.constant dense<0.000000e+00> : vector<128x128xf32>
    %16 = tpu.matmul %14, %15, %cst_14 {dimension_numbers = #tpu.dot_dimension_numbers<[1], [0], [0], [1], [0, 0, 1, 1], [], []>} : vector<128x512xf32>, vector<512x128xf32>, vector<128x128xf32> -> vector<128x128xf32>
    %c0_15 = arith.constant 0 : index
    %c0_16 = arith.constant 0 : index
    %17 = vector.load %arg7[%c0_15, %c0_16] : memref<1x128xf32, #tpu.memory_space<vmem>>, vector<1x128xf32>
    %18 = vector.broadcast %17 : vector<1x128xf32> to vector<128x128xf32>
    %19 = arith.addf %16, %18 : vector<128x128xf32>
    %c0_17 = arith.constant 0 : index
    %c0_18 = arith.constant 0 : index
    %20 = vector.load %arg8[%c0_17, %c0_18] : memref<128x128xf32, #tpu.memory_space<vmem>>, vector<128x128xf32>
    tpu.vector_store %arg8[%c0_17, %c0_18], %19 {strides = array<i32>} : memref<128x128xf32, #tpu.memory_space<vmem>>, vector<128x128xf32>,
    return
  }
  func.func @transform_0(%arg0: i32) -> (i32, i32) {
    %c0_i32 = arith.constant 0 : i32
    %c0_i32_0 = arith.constant 0 : i32
    return %arg0, %c0_i32 : i32, i32
  }
  func.func @transform_1(%arg0: i32) -> (i32, i32) {
    %c0_i32 = arith.constant 0 : i32
    %c0_i32_0 = arith.constant 0 : i32
    return %arg0, %c0_i32 : i32, i32
  }
  func.func @transform_2(%arg0: i32) -> (i32, i32) {
    %c0_i32 = arith.constant 0 : i32
    %c0_i32_0 = arith.constant 0 : i32
    %c0_i32_1 = arith.constant 0 : i32
    return %c0_i32, %c0_i32_0 : i32, i32
  }
  func.func @transform_3(%arg0: i32) -> (i32, i32) {
    %c0_i32 = arith.constant 0 : i32
    %c0_i32_0 = arith.constant 0 : i32
    %c0_i32_1 = arith.constant 0 : i32
    return %c0_i32, %c0_i32_0 : i32, i32
  }
  func.func @transform_4(%arg0: i32) -> (i32, i32) {
    %c0_i32 = arith.constant 0 : i32
    %c0_i32_0 = arith.constant 0 : i32
    %c0_i32_1 = arith.constant 0 : i32
    return %c0_i32, %c0_i32_0 : i32, i32
  }
  func.func @transform_5(%arg0: i32) -> (i32, i32) {
    %c0_i32 = arith.constant 0 : i32
    %c0_i32_0 = arith.constant 0 : i32
    %c0_i32_1 = arith.constant 0 : i32
    return %c0_i32, %c0_i32_0 : i32, i32
  }
  func.func @transform_6(%arg0: i32) -> (i32, i32) {
    %c0_i32 = arith.constant 0 : i32
    %c0_i32_0 = arith.constant 0 : i32
    %c0_i32_1 = arith.constant 0 : i32
    return %c0_i32, %c0_i32_0 : i32, i32
  }
  func.func @transform_7(%arg0: i32) -> (i32, i32) {
    %c0_i32 = arith.constant 0 : i32
    %c0_i32_0 = arith.constant 0 : i32
    return %arg0, %c0_i32 : i32, i32
  }
}

</mosaic_0001>

<llo_original>
// kernel: base_generator_forward.1
$region0: #{base_generator_forward.1}
  #allocation0 [shape = 'u32[]', space=smem, size = 0x4, offset = 0x4, fixed_abs, tag = 'smem constant byte address 0x4 - core index']
  #allocation1 [shape = 'u32[144,128]{1,0:T(1,128)}', space=vmem, size = 0x12000, scoped, tag = 'internal scratch']
  %s0 = inlined_call_operand.vmem [shape: f32[256,64], index: 0, kind: input, shape index: {}]
  %s1 = inlined_call_operand.vmem [shape: f32[256,64], index: 1, kind: input, shape index: {}]
  %s2 = inlined_call_operand.vmem [shape: f32[64,512], index: 2, kind: input, shape index: {}]
  %s3 = inlined_call_operand.vmem [shape: f32[64,512], index: 3, kind: input, shape index: {}]
  %s4 = inlined_call_operand.vmem [shape: f32[1,512], index: 4, kind: input, shape index: {}]
  %s5 = inlined_call_operand.vmem [shape: f32[512,128], index: 5, kind: input, shape index: {}]
  %s6 = inlined_call_operand.vmem [shape: f32[1,128], index: 6, kind: input, shape index: {}]
  %s7 = inlined_call_operand.vmem [shape: f32[256,128], index: 7, kind: output, shape index: {}]
  %s8 = sld [smem:[#allocation0]]
  $region61: #{base_generator_forward.1} parent=0
    _
  %s10 = ssub.s32 1, %s8
  %s11 = scalar_select 0, %s10, %s8
  loop: start=0, step=1, limit=4
  $region2: #{base_generator_forward.1} parent=0 // loop_pre_header
    _
  $region3: #{base_generator_forward.1} parent=0 // loop_header
    %s13 = sphi 0, %s17
    %p14 = scmp.ge.s32.totalorder %s13, 4
    %s23 = sphi 0, %s25
    %s26 = sphi 0, %s23
    %s27 = sphi 0, %s26
    %s43 = sphi 0, %s27
    %s49 = sphi 0, %s51
    %s52 = sphi 0, %s49
    %s53 = sphi 0, %s52
    %s69 = sphi 0, %s53
    %s73 = sphi 0, %s73
    %s75 = sphi 0, %s73
    %s76 = sphi 0, %s75
    %s90 = sphi 0, %s76
    %s94 = sphi 0, %s94
    %s96 = sphi 0, %s94
    %s97 = sphi 0, %s96
    %s111 = sphi 0, %s97
    %s115 = sphi 0, %s115
    %s117 = sphi 0, %s115
    %s118 = sphi 0, %s117
    %s132 = sphi 0, %s118
    %s136 = sphi 0, %s136
    %s138 = sphi 0, %s136
    %s139 = sphi 0, %s138
    %s153 = sphi 0, %s139
    %s157 = sphi 0, %s157
    %s159 = sphi 0, %s157
    %s160 = sphi 0, %s159
    %s174 = sphi 0, %s160
    %s180 = sphi 0, %s182
    %s183 = sphi 0, %s180
    %s184 = sphi 0, %s183
    %s200 = sphi 0, %s184
  $region4: #{base_generator_forward.1} parent=0 // loop_header_branch
    %16 = sbr.rel (%p14) target = $region8
  $region5: #{base_generator_forward.1} parent=0 // loop_body
    %s18 = ssub.s32 %s13, 1
    %s19 = ssub.s32 %s13, 2
    %s20 = sadd.s32 %s13, 1
    %s21 = ssub.s32 %s13, %s20
    %p22 = scmp.eq.s32.totalorder %s21, 0
    %s24 = sadd.s32 %s23, 1
    %s25 = scalar_select %p22, %s23, %s24
    %p28 = pneg %p22
    %p29 = scmp.eq.s32.totalorder %s13, 1
    %p30 = por %p28, %p29
    %p31 = scmp.ne.s32.totalorder %s23, %s26
    %p32 = scmp.eq.s32.totalorder %s13, 0
    %p33 = por %p31, %p32
    %p34 = scmp.ne.s32.totalorder %s23, %s26
    %p35 = scmp.eq.s32.totalorder %s18, 1
    %p36 = por %p34, %p35
    %p37 = scmp.ne.s32.totalorder %s26, %s27
    %p38 = scmp.eq.s32.totalorder %s18, 0
    %p39 = por %p37, %p38
    %p40 = scmp.ne.s32.totalorder %s26, %s27
    %p41 = scmp.eq.s32.totalorder %s19, 1
    %p42 = por %p40, %p41
    %p44 = scmp.ne.s32.totalorder %s27, %s43
    %p45 = scmp.eq.s32.totalorder %s19, 0
    %p46 = por %p44, %p45
    %s47 = ssub.s32 %s13, %s20
    %p48 = scmp.eq.s32.totalorder %s47, 0
    %s50 = sadd.s32 %s49, 1
    %s51 = scalar_select %p48, %s49, %s50
    %p54 = pneg %p48
    %p55 = scmp.eq.s32.totalorder %s13, 1
    %p56 = por %p54, %p55
    %p57 = scmp.ne.s32.totalorder %s49, %s52
    %p58 = scmp.eq.s32.totalorder %s13, 0
    %p59 = por %p57, %p58
    %p60 = scmp.ne.s32.totalorder %s49, %s52
    %p61 = scmp.eq.s32.totalorder %s18, 1
    %p62 = por %p60, %p61
    %p63 = scmp.ne.s32.totalorder %s52, %s53
    %p64 = scmp.eq.s32.totalorder %s18, 0
    %p65 = por %p63, %p64
    %p66 = scmp.ne.s32.totalorder %s52, %s53
    %p67 = scmp.eq.s32.totalorder %s19, 1
    %p68 = por %p66, %p67
    %p70 = scmp.ne.s32.totalorder %s53, %s69
    %p71 = scmp.eq.s32.totalorder %s19, 0
    %p72 = por %p70, %p71
    %s74 = sadd.s32 %s73, 1
    %p77 = scmp.eq.s32.totalorder %s13, 1
    %p78 = scmp.ne.s32.totalorder %s73, %s75
    %p79 = scmp.eq.s32.totalorder %s13, 0
    %p80 = por %p78, %p79
    %p81 = scmp.ne.s32.totalorder %s73, %s75
    %p82 = scmp.eq.s32.totalorder %s18, 1
    %p83 = por %p81, %p82
    %p84 = scmp.ne.s32.totalorder %s75, %s76
    %p85 = scmp.eq.s32.totalorder %s18, 0
    %p86 = por %p84, %p85
    %p87 = scmp.ne.s32.totalorder %s75, %s76
    %p88 = scmp.eq.s32.totalorder %s19, 1
    %p89 = por %p87, %p88
    %p91 = scmp.ne.s32.totalorder %s76, %s90
    %p92 = scmp.eq.s32.totalorder %s19, 0
    %p93 = por %p91, %p92
    %s95 = sadd.s32 %s94, 1
    %p98 = scmp.eq.s32.totalorder %s13, 1
    %p99 = scmp.ne.s32.totalorder %s94, %s96
    %p100 = scmp.eq.s32.totalorder %s13, 0
    %p101 = por %p99, %p100
    %p102 = scmp.ne.s32.totalorder %s94, %s96
    %p103 = scmp.eq.s32.totalorder %s18, 1
    %p104 = por %p102, %p103
    %p105 = scmp.ne.s32.totalorder %s96, %s97
    %p106 = scmp.eq.s32.totalorder %s18, 0
    %p107 = por %p105, %p106
    %p108 = scmp.ne.s32.totalorder %s96, %s97
    %p109 = scmp.eq.s32.totalorder %s19, 1
    %p110 = por %p108, %p109
    %p112 = scmp.ne.s32.totalorder %s97, %s111
    %p113 = scmp.eq.s32.totalorder %s19, 0
    %p114 = por %p112, %p113
    %s116 = sadd.s32 %s115, 1
    %p119 = scmp.eq.s32.totalorder %s13, 1
    %p120 = scmp.ne.s32.totalorder %s115, %s117
    %p121 = scmp.eq.s32.totalorder %s13, 0
    %p122 = por %p120, %p121
    %p123 = scmp.ne.s32.totalorder %s115, %s117
    %p124 = scmp.eq.s32.totalorder %s18, 1
    %p125 = por %p123, %p124
    %p126 = scmp.ne.s32.totalorder %s117, %s118
    %p127 = scmp.eq.s32.totalorder %s18, 0
    %p128 = por %p126, %p127
    %p129 = scmp.ne.s32.totalorder %s117, %s118
    %p130 = scmp.eq.s32.totalorder %s19, 1
    %p131 = por %p129, %p130
    %p133 = scmp.ne.s32.totalorder %s118, %s132
    %p134 = scmp.eq.s32.totalorder %s19, 0
    %p135 = por %p133, %p134
    %s137 = sadd.s32 %s136, 1
    %p140 = scmp.eq.s32.totalorder %s13, 1
    %p141 = scmp.ne.s32.totalorder %s136, %s138
    %p142 = scmp.eq.s32.totalorder %s13, 0
    %p143 = por %p141, %p142
    %p144 = scmp.ne.s32.totalorder %s136, %s138
    %p145 = scmp.eq.s32.totalorder %s18, 1
    %p146 = por %p144, %p145
    %p147 = scmp.ne.s32.totalorder %s138, %s139
    %p148 = scmp.eq.s32.totalorder %s18, 0
    %p149 = por %p147, %p148
    %p150 = scmp.ne.s32.totalorder %s138, %s139
    %p151 = scmp.eq.s32.totalorder %s19, 1
    %p152 = por %p150, %p151
    %p154 = scmp.ne.s32.totalorder %s139, %s153
    %p155 = scmp.eq.s32.totalorder %s19, 0
    %p156 = por %p154, %p155
    %s158 = sadd.s32 %s157, 1
    %p161 = scmp.eq.s32.totalorder %s13, 1
    %p162 = scmp.ne.s32.totalorder %s157, %s159
    %p163 = scmp.eq.s32.totalorder %s13, 0
    %p164 = por %p162, %p163
    %p165 = scmp.ne.s32.totalorder %s157, %s159
    %p166 = scmp.eq.s32.totalorder %s18, 1
    %p167 = por %p165, %p166
    %p168 = scmp.ne.s32.totalorder %s159, %s160
    %p169 = scmp.eq.s32.totalorder %s18, 0
    %p170 = por %p168, %p169
    %p171 = scmp.ne.s32.totalorder %s159, %s160
    %p172 = scmp.eq.s32.totalorder %s19, 1
    %p173 = por %p171, %p172
    %p175 = scmp.ne.s32.totalorder %s160, %s174
    %p176 = scmp.eq.s32.totalorder %s19, 0
    %p177 = por %p175, %p176
    %s178 = ssub.s32 %s13, %s20
    %p179 = scmp.eq.s32.totalorder %s178, 0
    %s181 = sadd.s32 %s180, 1
    %s182 = scalar_select %p179, %s180, %s181
    %p185 = pneg %p179
    %p186 = scmp.eq.s32.totalorder %s13, 1
    %p187 = por %p185, %p186
    %p188 = scmp.ne.s32.totalorder %s180, %s183
    %p189 = scmp.eq.s32.totalorder %s13, 0
    %p190 = por %p188, %p189
    %p191 = scmp.ne.s32.totalorder %s180, %s183
    %p192 = scmp.eq.s32.totalorder %s18, 1
    %p193 = por %p191, %p192
    %p194 = scmp.ne.s32.totalorder %s183, %s184
    %p195 = scmp.eq.s32.totalorder %s18, 0
    %p196 = por %p194, %p195
    %p197 = scmp.ne.s32.totalorder %s183, %s184
    %p198 = scmp.eq.s32.totalorder %s19, 1
    %p199 = por %p197, %p198
    %p201 = scmp.ne.s32.totalorder %s184, %s200
    %p202 = scmp.eq.s32.totalorder %s19, 0
    %p203 = por %p201, %p202
    %p204 = scmp.le.s32.totalorder 1, %s13
    %p205 = scmp.lt.s32.totalorder %s13, 3
    %p206 = pnand %p204, %p205
    %p207 = pneg %p206
    // Predicated region
    $region9: #{base_generator_forward.1} parent=5 // pred_check
      _
    $region10: #{base_generator_forward.1} parent=5 // pred_check_branch
      %209 = sbr.rel (%p206) target = $region12
    $region11: #{base_generator_forward.1} parent=5 // pred_region
      %s210 = ssub.s32 %s13, 1
      // Predicated region
      $region13: #{base_generator_forward.1} parent=11 // pred_check
        %p211 = pneg %p86
      $region14: #{base_generator_forward.1} parent=11 // pred_check_branch
        %213 = sbr.rel (%p211) target = $region16
      $region15: #{base_generator_forward.1} parent=11 // pred_region
        _
      $region16: #{base_generator_forward.1} parent=11 // pred_fallthru
        _
      // Predicated region
      $region17: #{base_generator_forward.1} parent=11 // pred_check
        %p214 = pneg %p107
      $region18: #{base_generator_forward.1} parent=11 // pred_check_branch
        %216 = sbr.rel (%p214) target = $region20
      $region19: #{base_generator_forward.1} parent=11 // pred_region
        _
      $region20: #{base_generator_forward.1} parent=11 // pred_fallthru
        _
      // Predicated region
      $region21: #{base_generator_forward.1} parent=11 // pred_check
        %p217 = pneg %p128
      $region22: #{base_generator_forward.1} parent=11 // pred_check_branch
        %219 = sbr.rel (%p217) target = $region24
      $region23: #{base_generator_forward.1} parent=11 // pred_region
        _
      $region24: #{base_generator_forward.1} parent=11 // pred_fallthru
        _
      // Predicated region
      $region25: #{base_generator_forward.1} parent=11 // pred_check
        %p220 = pneg %p149
      $region26: #{base_generator_forward.1} parent=11 // pred_check_branch
        %222 = sbr.rel (%p220) target = $region28
      $region27: #{base_generator_forward.1} parent=11 // pred_region
        _
      $region28: #{base_generator_forward.1} parent=11 // pred_fallthru
        _
      // Predicated region
      $region29: #{base_generator_forward.1} parent=11 // pred_check
        %p223 = pneg %p170
      $region30: #{base_generator_forward.1} parent=11 // pred_check_branch
        %225 = sbr.rel (%p223) target = $region32
      $region31: #{base_generator_forward.1} parent=11 // pred_region
        _
      $region32: #{base_generator_forward.1} parent=11 // pred_fallthru
        _
    $region12: #{base_generator_forward.1} parent=5 // pred_fallthru
      _
    %p226 = scmp.lt.s32.totalorder %s13, 2
    // Predicated region
    $region33: #{base_generator_forward.1} parent=5 // pred_check
      %p227 = pneg %p226
    $region34: #{base_generator_forward.1} parent=5 // pred_check_branch
      %229 = sbr.rel (%p227) target = $region36
    $region35: #{base_generator_forward.1} parent=5 // pred_region
      // Predicated region
      $region37: #{base_generator_forward.1} parent=35 // pred_check
        %p230 = pneg %p33
      $region38: #{base_generator_forward.1} parent=35 // pred_check_branch
        %232 = sbr.rel (%p230) target = $region40
      $region39: #{base_generator_forward.1} parent=35 // pred_region
        %s233 = smul.u32 16, %s13
        %p234 = scmp.lt.s32.totalorder %s233, 31
        %s235 = scalar_select %p234, %s233, 31
        %s236 = smul.addr %s235, 8
        %s237 = scalar_lea.vmem %s0, %s236
        %s238 = smul.u32 16, %s13
      $region40: #{base_generator_forward.1} parent=35 // pred_fallthru
        _
      // Predicated region
      $region41: #{base_generator_forward.1} parent=35 // pred_check
        %p239 = pneg %p59
      $region42: #{base_generator_forward.1} parent=35 // pred_check_branch
        %241 = sbr.rel (%p239) target = $region44
      $region43: #{base_generator_forward.1} parent=35 // pred_region
        %s242 = smul.u32 16, %s13
        %p243 = scmp.lt.s32.totalorder %s242, 31
        %s244 = scalar_select %p243, %s242, 31
        %s245 = smul.addr %s244, 8
        %s246 = scalar_lea.vmem %s1, %s245
        %s247 = smul.u32 16, %s13
      $region44: #{base_generator_forward.1} parent=35 // pred_fallthru
        _
    $region36: #{base_generator_forward.1} parent=5 // pred_fallthru
      _
    %p248 = scmp.le.s32.totalorder 1, %s13
    %p249 = scmp.lt.s32.totalorder %s13, 3
    %p250 = pnand %p248, %p249
    %p251 = pneg %p250
    // Predicated region
    $region45: #{base_generator_forward.1} parent=5 // pred_check
      _
    $region46: #{base_generator_forward.1} parent=5 // pred_check_branch
      %253 = sbr.rel (%p250) target = $region48
    $region47: #{base_generator_forward.1} parent=5 // pred_region
      %s254 = ssub.s32 %s13, 1
      %s255 = smul.u32 16, %s18
      %p256 = scmp.lt.s32.totalorder %s255, 31
      %s257 = scalar_select %p256, %s255, 31
      %s258 = smul.addr %s257, 8
      %s259 = scalar_lea.vmem %s0, %s258
      %p260 = pneg %p39
      %p261 = pneg %p36
      %s262 = smul.u32 16, %s18
      %p263 = scmp.lt.s32.totalorder %s262, 31
      %s264 = scalar_select %p263, %s262, 31
      %s265 = smul.addr %s264, 8
      %s266 = scalar_lea.vmem %s1, %s265
      %p267 = pneg %p65
      %p268 = pneg %p62
      %p269 = pneg %p86
      %p270 = pneg %p83
      %p271 = pneg %p107
      %p272 = pneg %p104
      %p273 = pneg %p128
      %p274 = pneg %p125
      %p275 = pneg %p149
      %p276 = pneg %p146
      %p277 = pneg %p170
      %p278 = pneg %p167
      %p279 = pneg %p196
      %p280 = pneg %p193
      %s281 = smul.u32 16, %s18
      %p282 = scmp.lt.s32.totalorder %s281, 31
      %s283 = scalar_select %p282, %s281, 31
      %s284 = smul.addr %s283, 8
      %s285 = scalar_lea.vmem %s7, %s284
      %s286 = smul.u32 16, %s18
      %p287 = scmp.lt.s32.totalorder %s286, 31
      %s288 = scalar_select %p287, %s286, 31
      %s289 = smul.addr %s288, 8
      %s290 = scalar_lea.vmem %s0, %s289
      %s291 = smul.u32 16, %s18
      %s292 = smul.u32 16, %s18
      %p293 = scmp.lt.s32.totalorder %s292, 31
      %s294 = scalar_select %p293, %s292, 31
      %s295 = smul.addr %s294, 8
      %s296 = scalar_lea.vmem %s1, %s295
      %s297 = smul.u32 16, %s18
      %s298 = smul.u32 16, %s18
      %p299 = scmp.lt.s32.totalorder %s298, 31
      %s300 = scalar_select %p299, %s298, 31
      %s301 = smul.addr %s300, 8
      %s302 = scalar_lea.vmem %s7, %s301
      %s303 = smul.u32 16, %s18
      %v304 = vld [vmem:[%s290] sm:$0xff]
      %v305 = vld [vmem:[%s290 + $0x8] sm:$0xff]
      %v306 = vld [vmem:[%s290 + $0x10] sm:$0xff]
      %v307 = vld [vmem:[%s290 + $0x18] sm:$0xff]
      %v308 = vld [vmem:[%s290 + $0x20] sm:$0xff]
      %v309 = vld [vmem:[%s290 + $0x28] sm:$0xff]
      %v310 = vld [vmem:[%s290 + $0x30] sm:$0xff]
      %v311 = vld [vmem:[%s290 + $0x38] sm:$0xff]
      %v312 = vld [vmem:[%s290 + $0x40] sm:$0xff]
      %v313 = vld [vmem:[%s290 + $0x48] sm:$0xff]
      %v314 = vld [vmem:[%s290 + $0x50] sm:$0xff]
      %v315 = vld [vmem:[%s290 + $0x58] sm:$0xff]
      %v316 = vld [vmem:[%s290 + $0x60] sm:$0xff]
      %v317 = vld [vmem:[%s290 + $0x68] sm:$0xff]
      %v318 = vld [vmem:[%s290 + $0x70] sm:$0xff]
      %v319 = vld [vmem:[%s290 + $0x78] sm:$0xff]
      %v320 = vld [vmem:[%s2] sm:$0xff]
      %v321 = vld [vmem:[%s2 + $0x8] sm:$0xff]
      %v322 = vld [vmem:[%s2 + $0x10] sm:$0xff]
      %v323 = vld [vmem:[%s2 + $0x18] sm:$0xff]
      %v324 = vld [vmem:[%s2 + $0x20] sm:$0xff]
      %v325 = vld [vmem:[%s2 + $0x28] sm:$0xff]
      %v326 = vld [vmem:[%s2 + $0x30] sm:$0xff]
      %v327 = vld [vmem:[%s2 + $0x38] sm:$0xff]
      %v328 = vld [vmem:[%s2 + $0x40] sm:$0xff]
      %v329 = vld [vmem:[%s2 + $0x48] sm:$0xff]
      %v330 = vld [vmem:[%s2 + $0x50] sm:$0xff]
      %v331 = vld [vmem:[%s2 + $0x58] sm:$0xff]
      %v332 = vld [vmem:[%s2 + $0x60] sm:$0xff]
      %v333 = vld [vmem:[%s2 + $0x68] sm:$0xff]
      %v334 = vld [vmem:[%s2 + $0x70] sm:$0xff]
      %v335 = vld [vmem:[%s2 + $0x78] sm:$0xff]
      %v336 = vld [vmem:[%s2 + $0x80] sm:$0xff]
      %v337 = vld [vmem:[%s2 + $0x88] sm:$0xff]
      %v338 = vld [vmem:[%s2 + $0x90] sm:$0xff]
      %v339 = vld [vmem:[%s2 + $0x98] sm:$0xff]
      %v340 = vld [vmem:[%s2 + $0xa0] sm:$0xff]
      %v341 = vld [vmem:[%s2 + $0xa8] sm:$0xff]
      %v342 = vld [vmem:[%s2 + $0xb0] sm:$0xff]
      %v343 = vld [vmem:[%s2 + $0xb8] sm:$0xff]
      %v344 = vld [vmem:[%s2 + $0xc0] sm:$0xff]
      %v345 = vld [vmem:[%s2 + $0xc8] sm:$0xff]
      %v346 = vld [vmem:[%s2 + $0xd0] sm:$0xff]
      %v347 = vld [vmem:[%s2 + $0xd8] sm:$0xff]
      %v348 = vld [vmem:[%s2 + $0xe0] sm:$0xff]
      %v349 = vld [vmem:[%s2 + $0xe8] sm:$0xff]
      %v350 = vld [vmem:[%s2 + $0xf0] sm:$0xff]
      %v351 = vld [vmem:[%s2 + $0xf8] sm:$0xff]
      %v352 = vld [vmem:[%s296] sm:$0xff]
      %v353 = vld [vmem:[%s296 + $0x8] sm:$0xff]
      %v354 = vld [vmem:[%s296 + $0x10] sm:$0xff]
      %v355 = vld [vmem:[%s296 + $0x18] sm:$0xff]
      %v356 = vld [vmem:[%s296 + $0x20] sm:$0xff]
      %v357 = vld [vmem:[%s296 + $0x28] sm:$0xff]
      %v358 = vld [vmem:[%s296 + $0x30] sm:$0xff]
      %v359 = vld [vmem:[%s296 + $0x38] sm:$0xff]
      %v360 = vld [vmem:[%s296 + $0x40] sm:$0xff]
      %v361 = vld [vmem:[%s296 + $0x48] sm:$0xff]
      %v362 = vld [vmem:[%s296 + $0x50] sm:$0xff]
      %v363 = vld [vmem:[%s296 + $0x58] sm:$0xff]
      %v364 = vld [vmem:[%s296 + $0x60] sm:$0xff]
      %v365 = vld [vmem:[%s296 + $0x68] sm:$0xff]
      %v366 = vld [vmem:[%s296 + $0x70] sm:$0xff]
      %v367 = vld [vmem:[%s296 + $0x78] sm:$0xff]
      %v368 = vld [vmem:[%s3] sm:$0xff]
      %v369 = vld [vmem:[%s3 + $0x8] sm:$0xff]
      %v370 = vld [vmem:[%s3 + $0x10] sm:$0xff]
      %v371 = vld [vmem:[%s3 + $0x18] sm:$0xff]
      %v372 = vld [vmem:[%s3 + $0x20] sm:$0xff]
      %v373 = vld [vmem:[%s3 + $0x28] sm:$0xff]
      %v374 = vld [vmem:[%s3 + $0x30] sm:$0xff]
      %v375 = vld [vmem:[%s3 + $0x38] sm:$0xff]
      %v376 = vld [vmem:[%s3 + $0x40] sm:$0xff]
      %v377 = vld [vmem:[%s3 + $0x48] sm:$0xff]
      %v378 = vld [vmem:[%s3 + $0x50] sm:$0xff]
      %v379 = vld [vmem:[%s3 + $0x58] sm:$0xff]
      %v380 = vld [vmem:[%s3 + $0x60] sm:$0xff]
      %v381 = vld [vmem:[%s3 + $0x68] sm:$0xff]
      %v382 = vld [vmem:[%s3 + $0x70] sm:$0xff]
      %v383 = vld [vmem:[%s3 + $0x78] sm:$0xff]
      %v384 = vld [vmem:[%s3 + $0x80] sm:$0xff]
      %v385 = vld [vmem:[%s3 + $0x88] sm:$0xff]
      %v386 = vld [vmem:[%s3 + $0x90] sm:$0xff]
      %v387 = vld [vmem:[%s3 + $0x98] sm:$0xff]
      %v388 = vld [vmem:[%s3 + $0xa0] sm:$0xff]
      %v389 = vld [vmem:[%s3 + $0xa8] sm:$0xff]
      %v390 = vld [vmem:[%s3 + $0xb0] sm:$0xff]
      %v391 = vld [vmem:[%s3 + $0xb8] sm:$0xff]
      %v392 = vld [vmem:[%s3 + $0xc0] sm:$0xff]
      %v393 = vld [vmem:[%s3 + $0xc8] sm:$0xff]
      %v394 = vld [vmem:[%s3 + $0xd0] sm:$0xff]
      %v395 = vld [vmem:[%s3 + $0xd8] sm:$0xff]
      %v396 = vld [vmem:[%s3 + $0xe0] sm:$0xff]
      %v397 = vld [vmem:[%s3 + $0xe8] sm:$0xff]
      %v398 = vld [vmem:[%s3 + $0xf0] sm:$0xff]
      %v399 = vld [vmem:[%s3 + $0xf8] sm:$0xff]
      %vm400 = vcmask 523264
      %v402 = vsel %vm400, %v352, 0
      %v405 = vsel %vm400, %v353, 0
      %v408 = vsel %vm400, %v354, 0
      %v411 = vsel %vm400, %v355, 0
      %v414 = vsel %vm400, %v356, 0
      %v417 = vsel %vm400, %v357, 0
      %v420 = vsel %vm400, %v358, 0
      %v423 = vsel %vm400, %v359, 0
      %v426 = vsel %vm400, %v360, 0
      %v429 = vsel %vm400, %v361, 0
      %v432 = vsel %vm400, %v362, 0
      %v435 = vsel %vm400, %v363, 0
      %v438 = vsel %vm400, %v364, 0
      %v441 = vsel %vm400, %v365, 0
      %v444 = vsel %vm400, %v366, 0
      %v447 = vsel %vm400, %v367, 0
      %449 = vmatprep.subr.mxu0 %v369
      %450 = vmatpush1.msra.mxu0 %v368
      %451 = vmatprep.subr.mxu0 %v373
      %452 = vmatpush1.msra.mxu0 %v372
      %453 = vmatprep.subr.mxu0 %v377
      %454 = vmatpush1.msra.mxu0 %v376
      %455 = vmatprep.subr.mxu0 %v381
      %456 = vmatpush1.msra.mxu0 %v380
      %457 = vmatprep.subr.mxu0 %v385
      %458 = vmatpush1.msra.mxu0 %v384
      %459 = vmatprep.subr.mxu0 %v389
      %460 = vmatpush1.msra.mxu0 %v388
      %461 = vmatprep.subr.mxu0 %v393
      %462 = vmatpush1.msra.mxu0 %v392
      %463 = vmatprep.subr.mxu0 %v397
      %464 = vmatpush1.msra.mxu0 %v396
      %465 = vmatprep.subr.mxu0 0.0
      %466 = vmatpush1.msra.mxu0 0.0
      %467 = vmatprep.subr.mxu0 0.0
      %468 = vmatpush1.msra.mxu0 0.0
      %469 = vmatprep.subr.mxu0 0.0
      %470 = vmatpush1.msra.mxu0 0.0
      %471 = vmatprep.subr.mxu0 0.0
      %472 = vmatpush1.msra.mxu0 0.0
      %473 = vmatprep.subr.mxu0 0.0
      %474 = vmatpush1.msra.mxu0 0.0
      %475 = vmatprep.subr.mxu0 0.0
      %476 = vmatpush1.msra.mxu0 0.0
      %477 = vmatprep.subr.mxu0 0.0
      %478 = vmatpush1.msra.mxu0 0.0
      %479 = vmatprep.subr.mxu0 0.0
      %480 = vmatpush1.msra.mxu0 0.0
      %481 = vmatprep.subr.mxu0 0.0
      %482 = vmatpush1.msra.mxu0 0.0
      %483 = vmatprep.subr.mxu0 0.0
      %484 = vmatpush1.msra.mxu0 0.0
      %485 = vmatprep.subr.mxu0 0.0
      %486 = vmatpush1.msra.mxu0 0.0
      %487 = vmatprep.subr.mxu0 0.0
      %488 = vmatpush1.msra.mxu0 0.0
      %489 = vmatprep.subr.mxu0 0.0
      %490 = vmatpush1.msra.mxu0 0.0
      %491 = vmatprep.subr.mxu0 0.0
      %492 = vmatpush1.msra.mxu0 0.0
      %493 = vmatprep.subr.mxu0 0.0
      %494 = vmatpush1.msra.mxu0 0.0
      %495 = vmatprep.subr.mxu0 0.0
      %496 = vmatpush1.msra.mxu0 0.0
      %497 = vmatprep.subr.mxu0 0.0
      %498 = vmatpush1.msra.mxu0 0.0
      %499 = vmatprep.subr.mxu0 0.0
      %500 = vmatpush1.msra.mxu0 0.0
      %501 = vmatprep.subr.mxu0 0.0
      %502 = vmatpush1.msra.mxu0 0.0
      %503 = vmatprep.subr.mxu0 0.0
      %504 = vmatpush1.msra.mxu0 0.0
      %505 = vmatprep.subr.mxu0 0.0
      %506 = vmatpush1.msra.mxu0 0.0
      %507 = vmatprep.subr.mxu0 0.0
      %508 = vmatpush1.msra.mxu0 0.0
      %509 = vmatprep.subr.mxu0 0.0
      %510 = vmatpush1.msra.mxu0 0.0
      %511 = vmatprep.subr.mxu0 0.0
      %512 = vmatpush1.msra.mxu0 0.0
      %513 = vmatprep.mubr.f32.mxu0 0.0
      %514 = vmatmul.mubr.f32.gmra.mrb[0].mxu0 %v402
      %v515 = vpop.f32.mrb[0].mxu0
      %v516 = vadd.f32 0.0, %v515
      %v517 = vpop.f32.mrb[0].mxu0
      %v518 = vadd.f32 0.0, %v517
      %519 = vmatprep.mubr.f32.mxu0 0.0
      %520 = vmatmul.mubr.f32.gmra.mrb[0].mxu0 %v405
      %v521 = vpop.f32.mrb[0].mxu0
      %v522 = vadd.f32 0.0, %v521
      %v523 = vpop.f32.mrb[0].mxu0
      %v524 = vadd.f32 0.0, %v523
      %525 = vmatprep.mubr.f32.mxu0 0.0
      %526 = vmatmul.mubr.f32.gmra.mrb[0].mxu0 %v408
      %v527 = vpop.f32.mrb[0].mxu0
      %v528 = vadd.f32 0.0, %v527
      %v529 = vpop.f32.mrb[0].mxu0
      %v530 = vadd.f32 0.0, %v529
      %531 = vmatprep.mubr.f32.mxu0 0.0
      %532 = vmatmul.mubr.f32.gmra.mrb[0].mxu0 %v411
      %v533 = vpop.f32.mrb[0].mxu0
      %v534 = vadd.f32 0.0, %v533
      %v535 = vpop.f32.mrb[0].mxu0
      %v536 = vadd.f32 0.0, %v535
      %537 = vmatprep.mubr.f32.mxu0 0.0
      %538 = vmatmul.mubr.f32.gmra.mrb[0].mxu0 %v414
      %v539 = vpop.f32.mrb[0].mxu0
      %v540 = vadd.f32 0.0, %v539
      %v541 = vpop.f32.mrb[0].mxu0
      %v542 = vadd.f32 0.0, %v541
      %543 = vmatprep.mubr.f32.mxu0 0.0
      %544 = vmatmul.mubr.f32.gmra.mrb[0].mxu0 %v417
      %v545 = vpop.f32.mrb[0].mxu0
      %v546 = vadd.f32 0.0, %v545
      %v547 = vpop.f32.mrb[0].mxu0
      %v548 = vadd.f32 0.0, %v547
      %549 = vmatprep.mubr.f32.mxu0 0.0
      %550 = vmatmul.mubr.f32.gmra.mrb[0].mxu0 %v420
      %v551 = vpop.f32.mrb[0].mxu0
      %v552 = vadd.f32 0.0, %v551
      %v553 = vpop.f32.mrb[0].mxu0
      %v554 = vadd.f32 0.0, %v553
      %555 = vmatprep.mubr.f32.mxu0 0.0
      %556 = vmatmul.mubr.f32.gmra.mrb[0].mxu0 %v423
      %v557 = vpop.f32.mrb[0].mxu0
      %v558 = vadd.f32 0.0, %v557
      %v559 = vpop.f32.mrb[0].mxu0
      %v560 = vadd.f32 0.0, %v559
      %561 = vmatprep.mubr.f32.mxu0 0.0
      %562 = vmatmul.mubr.f32.gmra.mrb[0].mxu0 %v426
      %v563 = vpop.f32.mrb[0].mxu0
      %v564 = vadd.f32 0.0, %v563
      %v565 = vpop.f32.mrb[0].mxu0
      %v566 = vadd.f32 0.0, %v565
      %567 = vmatprep.mubr.f32.mxu0 0.0
      %568 = vmatmul.mubr.f32.gmra.mrb[0].mxu0 %v429
      %v569 = vpop.f32.mrb[0].mxu0
      %v570 = vadd.f32 0.0, %v569
      %v571 = vpop.f32.mrb[0].mxu0
      %v572 = vadd.f32 0.0, %v571
      %573 = vmatprep.mubr.f32.mxu0 0.0
      %574 = vmatmul.mubr.f32.gmra.mrb[0].mxu0 %v432
      %v575 = vpop.f32.mrb[0].mxu0
      %v576 = vadd.f32 0.0, %v575
      %v577 = vpop.f32.mrb[0].mxu0
      %v578 = vadd.f32 0.0, %v577
      %579 = vmatprep.mubr.f32.mxu0 0.0
      %580 = vmatmul.mubr.f32.gmra.mrb[0].mxu0 %v435
      %v581 = vpop.f32.mrb[0].mxu0
      %v582 = vadd.f32 0.0, %v581
      %v583 = vpop.f32.mrb[0].mxu0
      %v584 = vadd.f32 0.0, %v583
      %585 = vmatprep.mubr.f32.mxu0 0.0
      %586 = vmatmul.mubr.f32.gmra.mrb[0].mxu0 %v438
      %v587 = vpop.f32.mrb[0].mxu0
      %v588 = vadd.f32 0.0, %v587
      %v589 = vpop.f32.mrb[0].mxu0
      %v590 = vadd.f32 0.0, %v589
      %591 = vmatprep.mubr.f32.mxu0 0.0
      %592 = vmatmul.mubr.f32.gmra.mrb[0].mxu0 %v441
      %v593 = vpop.f32.mrb[0].mxu0
      %v594 = vadd.f32 0.0, %v593
      %v595 = vpop.f32.mrb[0].mxu0
      %v596 = vadd.f32 0.0, %v595
      %597 = vmatprep.mubr.f32.mxu0 0.0
      %598 = vmatmul.mubr.f32.gmra.mrb[0].mxu0 %v444
      %v599 = vpop.f32.mrb[0].mxu0
      %v600 = vadd.f32 0.0, %v599
      %v601 = vpop.f32.mrb[0].mxu0
      %v602 = vadd.f32 0.0, %v601
      %603 = vmatprep.mubr.f32.mxu0 0.0
      %604 = vmatmul.mubr.f32.gmra.mrb[0].mxu0 %v447
      %v605 = vpop.f32.mrb[0].mxu0
      %v606 = vadd.f32 0.0, %v605
      %v607 = vpop.f32.mrb[0].mxu0
      %v608 = vadd.f32 0.0, %v607
      %609 = vdwg.mxu0
      %610 = vmatprep.subr.mxu0 %v371
      %611 = vmatpush1.msra.mxu0 %v370
      %612 = vmatprep.subr.mxu0 %v375
      %613 = vmatpush1.msra.mxu0 %v374
      %614 = vmatprep.subr.mxu0 %v379
      %615 = vmatpush1.msra.mxu0 %v378
      %616 = vmatprep.subr.mxu0 %v383
      %617 = vmatpush1.msra.mxu0 %v382
      %618 = vmatprep.subr.mxu0 %v387
      %619 = vmatpush1.msra.mxu0 %v386
      %620 = vmatprep.subr.mxu0 %v391
      %621 = vmatpush1.msra.mxu0 %v390
      %622 = vmatprep.subr.mxu0 %v395
      %623 = vmatpush1.msra.mxu0 %v394
      %624 = vmatprep.subr.mxu0 %v399
      %625 = vmatpush1.msra.mxu0 %v398
      %626 = vmatprep.subr.mxu0 0.0
      %627 = vmatpush1.msra.mxu0 0.0
      %628 = vmatprep.subr.mxu0 0.0
      %629 = vmatpush1.msra.mxu0 0.0
      %630 = vmatprep.subr.mxu0 0.0
      %631 = vmatpush1.msra.mxu0 0.0
      %632 = vmatprep.subr.mxu0 0.0
      %633 = vmatpush1.msra.mxu0 0.0
      %634 = vmatprep.subr.mxu0 0.0
      %635 = vmatpush1.msra.mxu0 0.0
      %636 = vmatprep.subr.mxu0 0.0
      %637 = vmatpush1.msra.mxu0 0.0
      %638 = vmatprep.subr.mxu0 0.0
      %639 = vmatpush1.msra.mxu0 0.0
      %640 = vmatprep.subr.mxu0 0.0
      %641 = vmatpush1.msra.mxu0 0.0
      %642 = vmatprep.subr.mxu0 0.0
      %643 = vmatpush1.msra.mxu0 0.0
      %644 = vmatprep.subr.mxu0 0.0
      %645 = vmatpush1.msra.mxu0 0.0
      %646 = vmatprep.subr.mxu0 0.0
      %647 = vmatpush1.msra.mxu0 0.0
      %648 = vmatprep.subr.mxu0 0.0
      %649 = vmatpush1.msra.mxu0 0.0
      %650 = vmatprep.subr.mxu0 0.0
      %651 = vmatpush1.msra.mxu0 0.0
      %652 = vmatprep.subr.mxu0 0.0
      %653 = vmatpush1.msra.mxu0 0.0
      %654 = vmatprep.subr.mxu0 0.0
      %655 = vmatpush1.msra.mxu0 0.0
      %656 = vmatprep.subr.mxu0 0.0
      %657 = vmatpush1.msra.mxu0 0.0
      %658 = vmatprep.subr.mxu0 0.0
      %659 = vmatpush1.msra.mxu0 0.0
      %660 = vmatprep.subr.mxu0 0.0
      %661 = vmatpush1.msra.mxu0 0.0
      %662 = vmatprep.subr.mxu0 0.0
      %663 = vmatpush1.msra.mxu0 0.0
      %664 = vmatprep.subr.mxu0 0.0
      %665 = vmatpush1.msra.mxu0 0.0
      %666 = vmatprep.subr.mxu0 0.0
      %667 = vmatpush1.msra.mxu0 0.0
      %668 = vmatprep.subr.mxu0 0.0
      %669 = vmatpush1.msra.mxu0 0.0
      %670 = vmatprep.subr.mxu0 0.0
      %671 = vmatpush1.msra.mxu0 0.0
      %672 = vmatprep.subr.mxu0 0.0
      %673 = vmatpush1.msra.mxu0 0.0
      %674 = vmatprep.mubr.f32.mxu0 0.0
      %675 = vmatmul.mubr.f32.gmra.mrb[0].mxu0 %v402
      %v676 = vpop.f32.mrb[0].mxu0
      %v677 = vadd.f32 0.0, %v676
      %v678 = vpop.f32.mrb[0].mxu0
      %v679 = vadd.f32 0.0, %v678
      %680 = vmatprep.mubr.f32.mxu0 0.0
      %681 = vmatmul.mubr.f32.gmra.mrb[0].mxu0 %v405
      %v682 = vpop.f32.mrb[0].mxu0
      %v683 = vadd.f32 0.0, %v682
      %v684 = vpop.f32.mrb[0].mxu0
      %v685 = vadd.f32 0.0, %v684
      %686 = vmatprep.mubr.f32.mxu0 0.0
      %687 = vmatmul.mubr.f32.gmra.mrb[0].mxu0 %v408
      %v688 = vpop.f32.mrb[0].mxu0
      %v689 = vadd.f32 0.0, %v688
      %v690 = vpop.f32.mrb[0].mxu0
      %v691 = vadd.f32 0.0, %v690
      %692 = vmatprep.mubr.f32.mxu0 0.0
      %693 = vmatmul.mubr.f32.gmra.mrb[0].mxu0 %v411
      %v694 = vpop.f32.mrb[0].mxu0
      %v695 = vadd.f32 0.0, %v694
      %v696 = vpop.f32.mrb[0].mxu0
      %v697 = vadd.f32 0.0, %v696
      %698 = vmatprep.mubr.f32.mxu0 0.0
      %699 = vmatmul.mubr.f32.gmra.mrb[0].mxu0 %v414
      %v700 = vpop.f32.mrb[0].mxu0
      %v701 = vadd.f32 0.0, %v700
      %v702 = vpop.f32.mrb[0].mxu0
      %v703 = vadd.f32 0.0, %v702
      %704 = vmatprep.mubr.f32.mxu0 0.0
      %705 = vmatmul.mubr.f32.gmra.mrb[0].mxu0 %v417
      %v706 = vpop.f32.mrb[0].mxu0
      %v707 = vadd.f32 0.0, %v706
      %v708 = vpop.f32.mrb[0].mxu0
      %v709 = vadd.f32 0.0, %v708
      %710 = vmatprep.mubr.f32.mxu0 0.0
      %711 = vmatmul.mubr.f32.gmra.mrb[0].mxu0 %v420
      %v712 = vpop.f32.mrb[0].mxu0
      %v713 = vadd.f32 0.0, %v712
      %v714 = vpop.f32.mrb[0].mxu0
      %v715 = vadd.f32 0.0, %v714
      %716 = vmatprep.mubr.f32.mxu0 0.0
      %717 = vmatmul.mubr.f32.gmra.mrb[0].mxu0 %v423
      %v718 = vpop.f32.mrb[0].mxu0
      %v719 = vadd.f32 0.0, %v718
      %v720 = vpop.f32.mrb[0].mxu0
      %v721 = vadd.f32 0.0, %v720
      %722 = vmatprep.mubr.f32.mxu0 0.0
      %723 = vmatmul.mubr.f32.gmra.mrb[0].mxu0 %v426
      %v724 = vpop.f32.mrb[0].mxu0
      %v725 = vadd.f32 0.0, %v724
      %v726 = vpop.f32.mrb[0].mxu0
      %v727 = vadd.f32 0.0, %v726
      %728 = vmatprep.mubr.f32.mxu0 0.0
      %729 = vmatmul.mubr.f32.gmra.mrb[0].mxu0 %v429
      %v730 = vpop.f32.mrb[0].mxu0
      %v731 = vadd.f32 0.0, %v730
      %v732 = vpop.f32.mrb[0].mxu0
      %v733 = vadd.f32 0.0, %v732
      %734 = vmatprep.mubr.f32.mxu0 0.0
      %735 = vmatmul.mubr.f32.gmra.mrb[0].mxu0 %v432
      %v736 = vpop.f32.mrb[0].mxu0
      %v737 = vadd.f32 0.0, %v736
      %v738 = vpop.f32.mrb[0].mxu0
      %v739 = vadd.f32 0.0, %v738
      %740 = vmatprep.mubr.f32.mxu0 0.0
      %741 = vmatmul.mubr.f32.gmra.mrb[0].mxu0 %v435
      %v742 = vpop.f32.mrb[0].mxu0
      %v743 = vadd.f32 0.0, %v742
      %v744 = vpop.f32.mrb[0].mxu0
      %v745 = vadd.f32 0.0, %v744
      %746 = vmatprep.mubr.f32.mxu0 0.0
      %747 = vmatmul.mubr.f32.gmra.mrb[0].mxu0 %v438
      %v748 = vpop.f32.mrb[0].mxu0
      %v749 = vadd.f32 0.0, %v748
      %v750 = vpop.f32.mrb[0].mxu0
      %v751 = vadd.f32 0.0, %v750
      %752 = vmatprep.mubr.f32.mxu0 0.0
      %753 = vmatmul.mubr.f32.gmra.mrb[0].mxu0 %v441
      %v754 = vpop.f32.mrb[0].mxu0
      %v755 = vadd.f32 0.0, %v754
      %v756 = vpop.f32.mrb[0].mxu0
      %v757 = vadd.f32 0.0, %v756
      %758 = vmatprep.mubr.f32.mxu0 0.0
      %759 = vmatmul.mubr.f32.gmra.mrb[0].mxu0 %v444
      %v760 = vpop.f32.mrb[0].mxu0
      %v761 = vadd.f32 0.0, %v760
      %v762 = vpop.f32.mrb[0].mxu0
      %v763 = vadd.f32 0.0, %v762
      %764 = vmatprep.mubr.f32.mxu0 0.0
      %765 = vmatmul.mubr.f32.gmra.mrb[0].mxu0 %v447
      %v766 = vpop.f32.mrb[0].mxu0
      %v767 = vadd.f32 0.0, %v766
      %v768 = vpop.f32.mrb[0].mxu0
      %v769 = vadd.f32 0.0, %v768
      %770 = vdwg.mxu0
      %v772 = vsel %vm400, %v304, 0
      %v775 = vsel %vm400, %v305, 0
      %v778 = vsel %vm400, %v306, 0
      %v781 = vsel %vm400, %v307, 0
      %v784 = vsel %vm400, %v308, 0
      %v787 = vsel %vm400, %v309, 0
      %v790 = vsel %vm400, %v310, 0
      %v793 = vsel %vm400, %v311, 0
      %v796 = vsel %vm400, %v312, 0
      %v799 = vsel %vm400, %v313, 0
      %v802 = vsel %vm400, %v314, 0
      %v805 = vsel %vm400, %v315, 0
      %v808 = vsel %vm400, %v316, 0
      %v811 = vsel %vm400, %v317, 0
      %v814 = vsel %vm400, %v318, 0
      %v817 = vsel %vm400, %v319, 0
      %819 = vmatprep.subr.mxu0 %v321
      %820 = vmatpush1.msra.mxu0 %v320
      %821 = vmatprep.subr.mxu0 %v325
      %822 = vmatpush1.msra.mxu0 %v324
      %823 = vmatprep.subr.mxu0 %v329
      %824 = vmatpush1.msra.mxu0 %v328
      %825 = vmatprep.subr.mxu0 %v333
      %826 = vmatpush1.msra.mxu0 %v332
      %827 = vmatprep.subr.mxu0 %v337
      %828 = vmatpush1.msra.mxu0 %v336
      %829 = vmatprep.subr.mxu0 %v341
      %830 = vmatpush1.msra.mxu0 %v340
      %831 = vmatprep.subr.mxu0 %v345
      %832 = vmatpush1.msra.mxu0 %v344
      %833 = vmatprep.subr.mxu0 %v349
      %834 = vmatpush1.msra.mxu0 %v348
      %835 = vmatprep.subr.mxu0 0.0
      %836 = vmatpush1.msra.mxu0 0.0
      %837 = vmatprep.subr.mxu0 0.0
      %838 = vmatpush1.msra.mxu0 0.0
      %839 = vmatprep.subr.mxu0 0.0
      %840 = vmatpush1.msra.mxu0 0.0
      %841 = vmatprep.subr.mxu0 0.0
      %842 = vmatpush1.msra.mxu0 0.0
      %843 = vmatprep.subr.mxu0 0.0
      %844 = vmatpush1.msra.mxu0 0.0
      %845 = vmatprep.subr.mxu0 0.0
      %846 = vmatpush1.msra.mxu0 0.0
      %847 = vmatprep.subr.mxu0 0.0
      %848 = vmatpush1.msra.mxu0 0.0
      %849 = vmatprep.subr.mxu0 0.0
      %850 = vmatpush1.msra.mxu0 0.0
      %851 = vmatprep.subr.mxu0 0.0
      %852 = vmatpush1.msra.mxu0 0.0
      %853 = vmatprep.subr.mxu0 0.0
      %854 = vmatpush1.msra.mxu0 0.0
      %855 = vmatprep.subr.mxu0 0.0
      %856 = vmatpush1.msra.mxu0 0.0
      %857 = vmatprep.subr.mxu0 0.0
      %858 = vmatpush1.msra.mxu0 0.0
      %859 = vmatprep.subr.mxu0 0.0
      %860 = vmatpush1.msra.mxu0 0.0
      %861 = vmatprep.subr.mxu0 0.0
      %862 = vmatpush1.msra.mxu0 0.0
      %863 = vmatprep.subr.mxu0 0.0
      %864 = vmatpush1.msra.mxu0 0.0
      %865 = vmatprep.subr.mxu0 0.0
      %866 = vmatpush1.msra.mxu0 0.0
      %867 = vmatprep.subr.mxu0 0.0
      %868 = vmatpush1.msra.mxu0 0.0
      %869 = vmatprep.subr.mxu0 0.0
      %870 = vmatpush1.msra.mxu0 0.0
      %871 = vmatprep.subr.mxu0 0.0
      %872 = vmatpush1.msra.mxu0 0.0
      %873 = vmatprep.subr.mxu0 0.0
      %874 = vmatpush1.msra.mxu0 0.0
      %875 = vmatprep.subr.mxu0 0.0
      %876 = vmatpush1.msra.mxu0 0.0
      %877 = vmatprep.subr.mxu0 0.0
      %878 = vmatpush1.msra.mxu0 0.0
      %879 = vmatprep.subr.mxu0 0.0
      %880 = vmatpush1.msra.mxu0 0.0
      %881 = vmatprep.subr.mxu0 0.0
      %882 = vmatpush1.msra.mxu0 0.0
      %883 = vmatprep.mubr.f32.mxu0 0.0
      %884 = vmatmul.mubr.f32.gmra.mrb[0].mxu0 %v772
      %v885 = vpop.f32.mrb[0].mxu0
      %v886 = vadd.f32 %v516, %v885
      %v887 = vpop.f32.mrb[0].mxu0
      %v888 = vadd.f32 %v518, %v887
      %889 = vmatprep.mubr.f32.mxu0 0.0
      %890 = vmatmul.mubr.f32.gmra.mrb[0].mxu0 %v775
      %v891 = vpop.f32.mrb[0].mxu0
      %v892 = vadd.f32 %v522, %v891
      %v893 = vpop.f32.mrb[0].mxu0
      %v894 = vadd.f32 %v524, %v893
      %895 = vmatprep.mubr.f32.mxu0 0.0
      %896 = vmatmul.mubr.f32.gmra.mrb[0].mxu0 %v778
      %v897 = vpop.f32.mrb[0].mxu0
      %v898 = vadd.f32 %v528, %v897
      %v899 = vpop.f32.mrb[0].mxu0
      %v900 = vadd.f32 %v530, %v899
      %901 = vmatprep.mubr.f32.mxu0 0.0
      %902 = vmatmul.mubr.f32.gmra.mrb[0].mxu0 %v781
      %v903 = vpop.f32.mrb[0].mxu0
      %v904 = vadd.f32 %v534, %v903
      %v905 = vpop.f32.mrb[0].mxu0
      %v906 = vadd.f32 %v536, %v905
      %907 = vmatprep.mubr.f32.mxu0 0.0
      %908 = vmatmul.mubr.f32.gmra.mrb[0].mxu0 %v784
      %v909 = vpop.f32.mrb[0].mxu0
      %v910 = vadd.f32 %v540, %v909
      %v911 = vpop.f32.mrb[0].mxu0
      %v912 = vadd.f32 %v542, %v911
      %913 = vmatprep.mubr.f32.mxu0 0.0
      %914 = vmatmul.mubr.f32.gmra.mrb[0].mxu0 %v787
      %v915 = vpop.f32.mrb[0].mxu0
      %v916 = vadd.f32 %v546, %v915
      %v917 = vpop.f32.mrb[0].mxu0
      %v918 = vadd.f32 %v548, %v917
      %919 = vmatprep.mubr.f32.mxu0 0.0
      %920 = vmatmul.mubr.f32.gmra.mrb[0].mxu0 %v790
      %v921 = vpop.f32.mrb[0].mxu0
      %v922 = vadd.f32 %v552, %v921
      %v923 = vpop.f32.mrb[0].mxu0
      %v924 = vadd.f32 %v554, %v923
      %925 = vmatprep.mubr.f32.mxu0 0.0
      %926 = vmatmul.mubr.f32.gmra.mrb[0].mxu0 %v793
      %v927 = vpop.f32.mrb[0].mxu0
      %v928 = vadd.f32 %v558, %v927
      %v929 = vpop.f32.mrb[0].mxu0
      %v930 = vadd.f32 %v560, %v929
      %931 = vmatprep.mubr.f32.mxu0 0.0
      %932 = vmatmul.mubr.f32.gmra.mrb[0].mxu0 %v796
      %v933 = vpop.f32.mrb[0].mxu0
      %v934 = vadd.f32 %v564, %v933
      %v935 = vpop.f32.mrb[0].mxu0
      %v936 = vadd.f32 %v566, %v935
      %937 = vmatprep.mubr.f32.mxu0 0.0
      %938 = vmatmul.mubr.f32.gmra.mrb[0].mxu0 %v799
      %v939 = vpop.f32.mrb[0].mxu0
      %v940 = vadd.f32 %v570, %v939
      %v941 = vpop.f32.mrb[0].mxu0
      %v942 = vadd.f32 %v572, %v941
      %943 = vmatprep.mubr.f32.mxu0 0.0
      %944 = vmatmul.mubr.f32.gmra.mrb[0].mxu0 %v802
      %v945 = vpop.f32.mrb[0].mxu0
      %v946 = vadd.f32 %v576, %v945
      %v947 = vpop.f32.mrb[0].mxu0
      %v948 = vadd.f32 %v578, %v947
      %949 = vmatprep.mubr.f32.mxu0 0.0
      %950 = vmatmul.mubr.f32.gmra.mrb[0].mxu0 %v805
      %v951 = vpop.f32.mrb[0].mxu0
      %v952 = vadd.f32 %v582, %v951
      %v953 = vpop.f32.mrb[0].mxu0
      %v954 = vadd.f32 %v584, %v953
      %955 = vmatprep.mubr.f32.mxu0 0.0
      %956 = vmatmul.mubr.f32.gmra.mrb[0].mxu0 %v808
      %v957 = vpop.f32.mrb[0].mxu0
      %v958 = vadd.f32 %v588, %v957
      %v959 = vpop.f32.mrb[0].mxu0
      %v960 = vadd.f32 %v590, %v959
      %961 = vmatprep.mubr.f32.mxu0 0.0
      %962 = vmatmul.mubr.f32.gmra.mrb[0].mxu0 %v811
      %v963 = vpop.f32.mrb[0].mxu0
      %v964 = vadd.f32 %v594, %v963
      %v965 = vpop.f32.mrb[0].mxu0
      %v966 = vadd.f32 %v596, %v965
      %967 = vmatprep.mubr.f32.mxu0 0.0
      %968 = vmatmul.mubr.f32.gmra.mrb[0].mxu0 %v814
      %v969 = vpop.f32.mrb[0].mxu0
      %v970 = vadd.f32 %v600, %v969
      %v971 = vpop.f32.mrb[0].mxu0
      %v972 = vadd.f32 %v602, %v971
      %973 = vmatprep.mubr.f32.mxu0 0.0
      %974 = vmatmul.mubr.f32.gmra.mrb[0].mxu0 %v817
      %v975 = vpop.f32.mrb[0].mxu0
      %v976 = vadd.f32 %v606, %v975
      %v977 = vpop.f32.mrb[0].mxu0
      %v978 = vadd.f32 %v608, %v977
      %979 = vdwg.mxu0
      %980 = vmatprep.subr.mxu0 %v323
      %981 = vmatpush1.msra.mxu0 %v322
      %982 = vmatprep.subr.mxu0 %v327
      %983 = vmatpush1.msra.mxu0 %v326
      %984 = vmatprep.subr.mxu0 %v331
      %985 = vmatpush1.msra.mxu0 %v330
      %986 = vmatprep.subr.mxu0 %v335
      %987 = vmatpush1.msra.mxu0 %v334
      %988 = vmatprep.subr.mxu0 %v339
      %989 = vmatpush1.msra.mxu0 %v338
      %990 = vmatprep.subr.mxu0 %v343
      %991 = vmatpush1.msra.mxu0 %v342
      %992 = vmatprep.subr.mxu0 %v347
      %993 = vmatpush1.msra.mxu0 %v346
      %994 = vmatprep.subr.mxu0 %v351
      %995 = vmatpush1.msra.mxu0 %v350
      %996 = vmatprep.subr.mxu0 0.0
      %997 = vmatpush1.msra.mxu0 0.0
      %998 = vmatprep.subr.mxu0 0.0
      %999 = vmatpush1.msra.mxu0 0.0
      %1000 = vmatprep.subr.mxu0 0.0
      %1001 = vmatpush1.msra.mxu0 0.0
      %1002 = vmatprep.subr.mxu0 0.0
      %1003 = vmatpush1.msra.mxu0 0.0
      %1004 = vmatprep.subr.mxu0 0.0
      %1005 = vmatpush1.msra.mxu0 0.0
      %1006 = vmatprep.subr.mxu0 0.0
      %1007 = vmatpush1.msra.mxu0 0.0
      %1008 = vmatprep.subr.mxu0 0.0
      %1009 = vmatpush1.msra.mxu0 0.0
      %1010 = vmatprep.subr.mxu0 0.0
      %1011 = vmatpush1.msra.mxu0 0.0
      %1012 = vmatprep.subr.mxu0 0.0
      %1013 = vmatpush1.msra.mxu0 0.0
      %1014 = vmatprep.subr.mxu0 0.0
      %1015 = vmatpush1.msra.mxu0 0.0
      %1016 = vmatprep.subr.mxu0 0.0
      %1017 = vmatpush1.msra.mxu0 0.0
      %1018 = vmatprep.subr.mxu0 0.0
      %1019 = vmatpush1.msra.mxu0 0.0
      %1020 = vmatprep.subr.mxu0 0.0
      %1021 = vmatpush1.msra.mxu0 0.0
      %1022 = vmatprep.subr.mxu0 0.0
      %1023 = vmatpush1.msra.mxu0 0.0
      %1024 = vmatprep.subr.mxu0 0.0
      %1025 = vmatpush1.msra.mxu0 0.0
      %1026 = vmatprep.subr.mxu0 0.0
      %1027 = vmatpush1.msra.mxu0 0.0
      %1028 = vmatprep.subr.mxu0 0.0
      %1029 = vmatpush1.msra.mxu0 0.0
      %1030 = vmatprep.subr.mxu0 0.0
      %1031 = vmatpush1.msra.mxu0 0.0
      %1032 = vmatprep.subr.mxu0 0.0
      %1033 = vmatpush1.msra.mxu0 0.0
      %1034 = vmatprep.subr.mxu0 0.0
      %1035 = vmatpush1.msra.mxu0 0.0
      %1036 = vmatprep.subr.mxu0 0.0
      %1037 = vmatpush1.msra.mxu0 0.0
      %1038 = vmatprep.subr.mxu0 0.0
      %1039 = vmatpush1.msra.mxu0 0.0
      %1040 = vmatprep.subr.mxu0 0.0
      %1041 = vmatpush1.msra.mxu0 0.0
      %1042 = vmatprep.subr.mxu0 0.0
      %1043 = vmatpush1.msra.mxu0 0.0
      %1044 = vmatprep.mubr.f32.mxu0 0.0
      %1045 = vmatmul.mubr.f32.gmra.mrb[0].mxu0 %v772
      %v1046 = vpop.f32.mrb[0].mxu0
      %v1047 = vadd.f32 %v677, %v1046
      %v1048 = vpop.f32.mrb[0].mxu0
      %v1049 = vadd.f32 %v679, %v1048
      %1050 = vmatprep.mubr.f32.mxu0 0.0
      %1051 = vmatmul.mubr.f32.gmra.mrb[0].mxu0 %v775
      %v1052 = vpop.f32.mrb[0].mxu0
      %v1053 = vadd.f32 %v683, %v1052
      %v1054 = vpop.f32.mrb[0].mxu0
      %v1055 = vadd.f32 %v685, %v1054
      %1056 = vmatprep.mubr.f32.mxu0 0.0
      %1057 = vmatmul.mubr.f32.gmra.mrb[0].mxu0 %v778
      %v1058 = vpop.f32.mrb[0].mxu0
      %v1059 = vadd.f32 %v689, %v1058
      %v1060 = vpop.f32.mrb[0].mxu0
      %v1061 = vadd.f32 %v691, %v1060
      %1062 = vmatprep.mubr.f32.mxu0 0.0
      %1063 = vmatmul.mubr.f32.gmra.mrb[0].mxu0 %v781
      %v1064 = vpop.f32.mrb[0].mxu0
      %v1065 = vadd.f32 %v695, %v1064
      %v1066 = vpop.f32.mrb[0].mxu0
      %v1067 = vadd.f32 %v697, %v1066
      %1068 = vmatprep.mubr.f32.mxu0 0.0
      %1069 = vmatmul.mubr.f32.gmra.mrb[0].mxu0 %v784
      %v1070 = vpop.f32.mrb[0].mxu0
      %v1071 = vadd.f32 %v701, %v1070
      %v1072 = vpop.f32.mrb[0].mxu0
      %v1073 = vadd.f32 %v703, %v1072
      %1074 = vmatprep.mubr.f32.mxu0 0.0
      %1075 = vmatmul.mubr.f32.gmra.mrb[0].mxu0 %v787
      %v1076 = vpop.f32.mrb[0].mxu0
      %v1077 = vadd.f32 %v707, %v1076
      %v1078 = vpop.f32.mrb[0].mxu0
      %v1079 = vadd.f32 %v709, %v1078
      %1080 = vmatprep.mubr.f32.mxu0 0.0
      %1081 = vmatmul.mubr.f32.gmra.mrb[0].mxu0 %v790
      %v1082 = vpop.f32.mrb[0].mxu0
      %v1083 = vadd.f32 %v713, %v1082
      %v1084 = vpop.f32.mrb[0].mxu0
      %v1085 = vadd.f32 %v715, %v1084
      %1086 = vmatprep.mubr.f32.mxu0 0.0
      %1087 = vmatmul.mubr.f32.gmra.mrb[0].mxu0 %v793
      %v1088 = vpop.f32.mrb[0].mxu0
      %v1089 = vadd.f32 %v719, %v1088
      %v1090 = vpop.f32.mrb[0].mxu0
      %v1091 = vadd.f32 %v721, %v1090
      %1092 = vmatprep.mubr.f32.mxu0 0.0
      %1093 = vmatmul.mubr.f32.gmra.mrb[0].mxu0 %v796
      %v1094 = vpop.f32.mrb[0].mxu0
      %v1095 = vadd.f32 %v725, %v1094
      %v1096 = vpop.f32.mrb[0].mxu0
      %v1097 = vadd.f32 %v727, %v1096
      %1098 = vmatprep.mubr.f32.mxu0 0.0
      %1099 = vmatmul.mubr.f32.gmra.mrb[0].mxu0 %v799
      %v1100 = vpop.f32.mrb[0].mxu0
      %v1101 = vadd.f32 %v731, %v1100
      %v1102 = vpop.f32.mrb[0].mxu0
      %v1103 = vadd.f32 %v733, %v1102
      %1104 = vmatprep.mubr.f32.mxu0 0.0
      %1105 = vmatmul.mubr.f32.gmra.mrb[0].mxu0 %v802
      %v1106 = vpop.f32.mrb[0].mxu0
      %v1107 = vadd.f32 %v737, %v1106
      %v1108 = vpop.f32.mrb[0].mxu0
      %v1109 = vadd.f32 %v739, %v1108
      %1110 = vmatprep.mubr.f32.mxu0 0.0
      %1111 = vmatmul.mubr.f32.gmra.mrb[0].mxu0 %v805
      %v1112 = vpop.f32.mrb[0].mxu0
      %v1113 = vadd.f32 %v743, %v1112
      %v1114 = vpop.f32.mrb[0].mxu0
      %v1115 = vadd.f32 %v745, %v1114
      %1116 = vmatprep.mubr.f32.mxu0 0.0
      %1117 = vmatmul.mubr.f32.gmra.mrb[0].mxu0 %v808
      %v1118 = vpop.f32.mrb[0].mxu0
      %v1119 = vadd.f32 %v749, %v1118
      %v1120 = vpop.f32.mrb[0].mxu0
      %v1121 = vadd.f32 %v751, %v1120
      %1122 = vmatprep.mubr.f32.mxu0 0.0
      %1123 = vmatmul.mubr.f32.gmra.mrb[0].mxu0 %v811
      %v1124 = vpop.f32.mrb[0].mxu0
      %v1125 = vadd.f32 %v755, %v1124
      %v1126 = vpop.f32.mrb[0].mxu0
      %v1127 = vadd.f32 %v757, %v1126
      %1128 = vmatprep.mubr.f32.mxu0 0.0
      %1129 = vmatmul.mubr.f32.gmra.mrb[0].mxu0 %v814
      %v1130 = vpop.f32.mrb[0].mxu0
      %v1131 = vadd.f32 %v761, %v1130
      %v1132 = vpop.f32.mrb[0].mxu0
      %v1133 = vadd.f32 %v763, %v1132
      %1134 = vmatprep.mubr.f32.mxu0 0.0
      %1135 = vmatmul.mubr.f32.gmra.mrb[0].mxu0 %v817
      %v1136 = vpop.f32.mrb[0].mxu0
      %v1137 = vadd.f32 %v767, %v1136
      %v1138 = vpop.f32.mrb[0].mxu0
      %v1139 = vadd.f32 %v769, %v1138
      %1140 = vdwg.mxu0
      %v1141 = vld [vmem:[%s4] sm:$0xf]
      %v1143 = vlaneseq
      %v1144 = vshrl.u32 %v1143, 7
      %v1145 = vsub.s32 0, %v1144
      %v1146 = vrot.slane %v1141, %v1145
      %v1147 = vlaneseq
      %v1148 = vshrl.u32 %v1147, 7
      %v1149 = vsub.s32 1, %v1148
      %v1150 = vrot.slane %v1141, %v1149
      %v1151 = vlaneseq
      %v1152 = vshrl.u32 %v1151, 7
      %v1153 = vsub.s32 2, %v1152
      %v1154 = vrot.slane %v1141, %v1153
      %v1155 = vlaneseq
      %v1156 = vshrl.u32 %v1155, 7
      %v1157 = vsub.s32 3, %v1156
      %v1158 = vrot.slane %v1141, %v1157
      %v1163 = vadd.f32 %v886, %v1146
      %v1164 = vadd.f32 %v888, %v1150
      %v1165 = vadd.f32 %v1047, %v1154
      %v1166 = vadd.f32 %v1049, %v1158
      %v1167 = vadd.f32 %v892, %v1146
      %v1168 = vadd.f32 %v894, %v1150
      %v1169 = vadd.f32 %v1053, %v1154
      %v1170 = vadd.f32 %v1055, %v1158
      %v1171 = vadd.f32 %v898, %v1146
      %v1172 = vadd.f32 %v900, %v1150
      %v1173 = vadd.f32 %v1059, %v1154
      %v1174 = vadd.f32 %v1061, %v1158
      %v1175 = vadd.f32 %v904, %v1146
      %v1176 = vadd.f32 %v906, %v1150
      %v1177 = vadd.f32 %v1065, %v1154
      %v1178 = vadd.f32 %v1067, %v1158
      %v1179 = vadd.f32 %v910, %v1146
      %v1180 = vadd.f32 %v912, %v1150
      %v1181 = vadd.f32 %v1071, %v1154
      %v1182 = vadd.f32 %v1073, %v1158
      %v1183 = vadd.f32 %v916, %v1146
      %v1184 = vadd.f32 %v918, %v1150
      %v1185 = vadd.f32 %v1077, %v1154
      %v1186 = vadd.f32 %v1079, %v1158
      %v1187 = vadd.f32 %v922, %v1146
      %v1188 = vadd.f32 %v924, %v1150
      %v1189 = vadd.f32 %v1083, %v1154
      %v1190 = vadd.f32 %v1085, %v1158
      %v1191 = vadd.f32 %v928, %v1146
      %v1192 = vadd.f32 %v930, %v1150
      %v1193 = vadd.f32 %v1089, %v1154
      %v1194 = vadd.f32 %v1091, %v1158
      %v1195 = vadd.f32 %v934, %v1146
      %v1196 = vadd.f32 %v936, %v1150
      %v1197 = vadd.f32 %v1095, %v1154
      %v1198 = vadd.f32 %v1097, %v1158
      %v1199 = vadd.f32 %v940, %v1146
      %v1200 = vadd.f32 %v942, %v1150
      %v1201 = vadd.f32 %v1101, %v1154
      %v1202 = vadd.f32 %v1103, %v1158
      %v1203 = vadd.f32 %v946, %v1146
      %v1204 = vadd.f32 %v948, %v1150
      %v1205 = vadd.f32 %v1107, %v1154
      %v1206 = vadd.f32 %v1109, %v1158
      %v1207 = vadd.f32 %v952, %v1146
      %v1208 = vadd.f32 %v954, %v1150
      %v1209 = vadd.f32 %v1113, %v1154
      %v1210 = vadd.f32 %v1115, %v1158
      %v1211 = vadd.f32 %v958, %v1146
      %v1212 = vadd.f32 %v960, %v1150
      %v1213 = vadd.f32 %v1119, %v1154
      %v1214 = vadd.f32 %v1121, %v1158
      %v1215 = vadd.f32 %v964, %v1146
      %v1216 = vadd.f32 %v966, %v1150
      %v1217 = vadd.f32 %v1125, %v1154
      %v1218 = vadd.f32 %v1127, %v1158
      %v1219 = vadd.f32 %v970, %v1146
      %v1220 = vadd.f32 %v972, %v1150
      %v1221 = vadd.f32 %v1131, %v1154
      %v1222 = vadd.f32 %v1133, %v1158
      %v1223 = vadd.f32 %v976, %v1146
      %v1224 = vadd.f32 %v978, %v1150
      %v1225 = vadd.f32 %v1137, %v1154
      %v1226 = vadd.f32 %v1139, %v1158
      %vm1227 = vcmp.gt.f32.partialorder %v1163, 0.0
      %vm1228 = vcmp.gt.f32.partialorder %v1164, 0.0
      %vm1229 = vcmp.gt.f32.partialorder %v1165, 0.0
      %vm1230 = vcmp.gt.f32.partialorder %v1166, 0.0
      %vm1231 = vcmp.gt.f32.partialorder %v1167, 0.0
      %vm1232 = vcmp.gt.f32.partialorder %v1168, 0.0
      %vm1233 = vcmp.gt.f32.partialorder %v1169, 0.0
      %vm1234 = vcmp.gt.f32.partialorder %v1170, 0.0
      %vm1235 = vcmp.gt.f32.partialorder %v1171, 0.0
      %vm1236 = vcmp.gt.f32.partialorder %v1172, 0.0
      %vm1237 = vcmp.gt.f32.partialorder %v1173, 0.0
      %vm1238 = vcmp.gt.f32.partialorder %v1174, 0.0
      %vm1239 = vcmp.gt.f32.partialorder %v1175, 0.0
      %vm1240 = vcmp.gt.f32.partialorder %v1176, 0.0
      %vm1241 = vcmp.gt.f32.partialorder %v1177, 0.0
      %vm1242 = vcmp.gt.f32.partialorder %v1178, 0.0
      %vm1243 = vcmp.gt.f32.partialorder %v1179, 0.0
      %vm1244 = vcmp.gt.f32.partialorder %v1180, 0.0
      %vm1245 = vcmp.gt.f32.partialorder %v1181, 0.0
      %vm1246 = vcmp.gt.f32.partialorder %v1182, 0.0
      %vm1247 = vcmp.gt.f32.partialorder %v1183, 0.0
      %vm1248 = vcmp.gt.f32.partialorder %v1184, 0.0
      %vm1249 = vcmp.gt.f32.partialorder %v1185, 0.0
      %vm1250 = vcmp.gt.f32.partialorder %v1186, 0.0
      %vm1251 = vcmp.gt.f32.partialorder %v1187, 0.0
      %vm1252 = vcmp.gt.f32.partialorder %v1188, 0.0
      %vm1253 = vcmp.gt.f32.partialorder %v1189, 0.0
      %vm1254 = vcmp.gt.f32.partialorder %v1190, 0.0
      %vm1255 = vcmp.gt.f32.partialorder %v1191, 0.0
      %vm1256 = vcmp.gt.f32.partialorder %v1192, 0.0
      %vm1257 = vcmp.gt.f32.partialorder %v1193, 0.0
      %vm1258 = vcmp.gt.f32.partialorder %v1194, 0.0
      %vm1259 = vcmp.gt.f32.partialorder %v1195, 0.0
      %vm1260 = vcmp.gt.f32.partialorder %v1196, 0.0
      %vm1261 = vcmp.gt.f32.partialorder %v1197, 0.0
      %vm1262 = vcmp.gt.f32.partialorder %v1198, 0.0
      %vm1263 = vcmp.gt.f32.partialorder %v1199, 0.0
      %vm1264 = vcmp.gt.f32.partialorder %v1200, 0.0
      %vm1265 = vcmp.gt.f32.partialorder %v1201, 0.0
      %vm1266 = vcmp.gt.f32.partialorder %v1202, 0.0
      %vm1267 = vcmp.gt.f32.partialorder %v1203, 0.0
      %vm1268 = vcmp.gt.f32.partialorder %v1204, 0.0
      %vm1269 = vcmp.gt.f32.partialorder %v1205, 0.0
      %vm1270 = vcmp.gt.f32.partialorder %v1206, 0.0
      %vm1271 = vcmp.gt.f32.partialorder %v1207, 0.0
      %vm1272 = vcmp.gt.f32.partialorder %v1208, 0.0
      %vm1273 = vcmp.gt.f32.partialorder %v1209, 0.0
      %vm1274 = vcmp.gt.f32.partialorder %v1210, 0.0
      %vm1275 = vcmp.gt.f32.partialorder %v1211, 0.0
      %vm1276 = vcmp.gt.f32.partialorder %v1212, 0.0
      %vm1277 = vcmp.gt.f32.partialorder %v1213, 0.0
      %vm1278 = vcmp.gt.f32.partialorder %v1214, 0.0
      %vm1279 = vcmp.gt.f32.partialorder %v1215, 0.0
      %vm1280 = vcmp.gt.f32.partialorder %v1216, 0.0
      %vm1281 = vcmp.gt.f32.partialorder %v1217, 0.0
      %vm1282 = vcmp.gt.f32.partialorder %v1218, 0.0
      %vm1283 = vcmp.gt.f32.partialorder %v1219, 0.0
      %vm1284 = vcmp.gt.f32.partialorder %v1220, 0.0
      %vm1285 = vcmp.gt.f32.partialorder %v1221, 0.0
      %vm1286 = vcmp.gt.f32.partialorder %v1222, 0.0
      %vm1287 = vcmp.gt.f32.partialorder %v1223, 0.0
      %vm1288 = vcmp.gt.f32.partialorder %v1224, 0.0
      %vm1289 = vcmp.gt.f32.partialorder %v1225, 0.0
      %vm1290 = vcmp.gt.f32.partialorder %v1226, 0.0
      %v1291 = vmul.f32 %v1163, 0.01
      %v1292 = vmul.f32 %v1164, 0.01
      %v1293 = vmul.f32 %v1165, 0.01
      %v1294 = vmul.f32 %v1166, 0.01
      %v1295 = vmul.f32 %v1167, 0.01
      %v1296 = vmul.f32 %v1168, 0.01
      %v1297 = vmul.f32 %v1169, 0.01
      %v1298 = vmul.f32 %v1170, 0.01
      %v1299 = vmul.f32 %v1171, 0.01
      %v1300 = vmul.f32 %v1172, 0.01
      %v1301 = vmul.f32 %v1173, 0.01
      %v1302 = vmul.f32 %v1174, 0.01
      %v1303 = vmul.f32 %v1175, 0.01
      %v1304 = vmul.f32 %v1176, 0.01
      %v1305 = vmul.f32 %v1177, 0.01
      %v1306 = vmul.f32 %v1178, 0.01
      %v1307 = vmul.f32 %v1179, 0.01
      %v1308 = vmul.f32 %v1180, 0.01
      %v1309 = vmul.f32 %v1181, 0.01
      %v1310 = vmul.f32 %v1182, 0.01
      %v1311 = vmul.f32 %v1183, 0.01
      %v1312 = vmul.f32 %v1184, 0.01
      %v1313 = vmul.f32 %v1185, 0.01
      %v1314 = vmul.f32 %v1186, 0.01
      %v1315 = vmul.f32 %v1187, 0.01
      %v1316 = vmul.f32 %v1188, 0.01
      %v1317 = vmul.f32 %v1189, 0.01
      %v1318 = vmul.f32 %v1190, 0.01
      %v1319 = vmul.f32 %v1191, 0.01
      %v1320 = vmul.f32 %v1192, 0.01
      %v1321 = vmul.f32 %v1193, 0.01
      %v1322 = vmul.f32 %v1194, 0.01
      %v1323 = vmul.f32 %v1195, 0.01
      %v1324 = vmul.f32 %v1196, 0.01
      %v1325 = vmul.f32 %v1197, 0.01
      %v1326 = vmul.f32 %v1198, 0.01
      %v1327 = vmul.f32 %v1199, 0.01
      %v1328 = vmul.f32 %v1200, 0.01
      %v1329 = vmul.f32 %v1201, 0.01
      %v1330 = vmul.f32 %v1202, 0.01
      %v1331 = vmul.f32 %v1203, 0.01
      %v1332 = vmul.f32 %v1204, 0.01
      %v1333 = vmul.f32 %v1205, 0.01
      %v1334 = vmul.f32 %v1206, 0.01
      %v1335 = vmul.f32 %v1207, 0.01
      %v1336 = vmul.f32 %v1208, 0.01
      %v1337 = vmul.f32 %v1209, 0.01
      %v1338 = vmul.f32 %v1210, 0.01
      %v1339 = vmul.f32 %v1211, 0.01
      %v1340 = vmul.f32 %v1212, 0.01
      %v1341 = vmul.f32 %v1213, 0.01
      %v1342 = vmul.f32 %v1214, 0.01
      %v1343 = vmul.f32 %v1215, 0.01
      %v1344 = vmul.f32 %v1216, 0.01
      %v1345 = vmul.f32 %v1217, 0.01
      %v1346 = vmul.f32 %v1218, 0.01
      %v1347 = vmul.f32 %v1219, 0.01
      %v1348 = vmul.f32 %v1220, 0.01
      %v1349 = vmul.f32 %v1221, 0.01
      %v1350 = vmul.f32 %v1222, 0.01
      %v1351 = vmul.f32 %v1223, 0.01
      %v1352 = vmul.f32 %v1224, 0.01
      %v1353 = vmul.f32 %v1225, 0.01
      %v1354 = vmul.f32 %v1226, 0.01
      %v1355 = vsel %vm1227, %v1163, %v1291
      %v1356 = vsel %vm1228, %v1164, %v1292
      %v1357 = vsel %vm1229, %v1165, %v1293
      %v1358 = vsel %vm1230, %v1166, %v1294
      %v1359 = vsel %vm1231, %v1167, %v1295
      %v1360 = vsel %vm1232, %v1168, %v1296
      %v1361 = vsel %vm1233, %v1169, %v1297
      %v1362 = vsel %vm1234, %v1170, %v1298
      %v1363 = vsel %vm1235, %v1171, %v1299
      %v1364 = vsel %vm1236, %v1172, %v1300
      %v1365 = vsel %vm1237, %v1173, %v1301
      %v1366 = vsel %vm1238, %v1174, %v1302
      %v1367 = vsel %vm1239, %v1175, %v1303
      %v1368 = vsel %vm1240, %v1176, %v1304
      %v1369 = vsel %vm1241, %v1177, %v1305
      %v1370 = vsel %vm1242, %v1178, %v1306
      %v1371 = vsel %vm1243, %v1179, %v1307
      %v1372 = vsel %vm1244, %v1180, %v1308
      %v1373 = vsel %vm1245, %v1181, %v1309
      %v1374 = vsel %vm1246, %v1182, %v1310
      %v1375 = vsel %vm1247, %v1183, %v1311
      %v1376 = vsel %vm1248, %v1184, %v1312
      %v1377 = vsel %vm1249, %v1185, %v1313
      %v1378 = vsel %vm1250, %v1186, %v1314
      %v1379 = vsel %vm1251, %v1187, %v1315
      %v1380 = vsel %vm1252, %v1188, %v1316
      %v1381 = vsel %vm1253, %v1189, %v1317
      %v1382 = vsel %vm1254, %v1190, %v1318
      %v1383 = vsel %vm1255, %v1191, %v1319
      %v1384 = vsel %vm1256, %v1192, %v1320
      %v1385 = vsel %vm1257, %v1193, %v1321
      %v1386 = vsel %vm1258, %v1194, %v1322
      %v1387 = vsel %vm1259, %v1195, %v1323
      %v1388 = vsel %vm1260, %v1196, %v1324
      %v1389 = vsel %vm1261, %v1197, %v1325
      %v1390 = vsel %vm1262, %v1198, %v1326
      %v1391 = vsel %vm1263, %v1199, %v1327
      %v1392 = vsel %vm1264, %v1200, %v1328
      %v1393 = vsel %vm1265, %v1201, %v1329
      %v1394 = vsel %vm1266, %v1202, %v1330
      %v1395 = vsel %vm1267, %v1203, %v1331
      %v1396 = vsel %vm1268, %v1204, %v1332
      %v1397 = vsel %vm1269, %v1205, %v1333
      %v1398 = vsel %vm1270, %v1206, %v1334
      %v1399 = vsel %vm1271, %v1207, %v1335
      %v1400 = vsel %vm1272, %v1208, %v1336
      %v1401 = vsel %vm1273, %v1209, %v1337
      %v1402 = vsel %vm1274, %v1210, %v1338
      %v1403 = vsel %vm1275, %v1211, %v1339
      %v1404 = vsel %vm1276, %v1212, %v1340
      %v1405 = vsel %vm1277, %v1213, %v1341
      %v1406 = vsel %vm1278, %v1214, %v1342
      %v1407 = vsel %vm1279, %v1215, %v1343
      %v1408 = vsel %vm1280, %v1216, %v1344
      %v1409 = vsel %vm1281, %v1217, %v1345
      %v1410 = vsel %vm1282, %v1218, %v1346
      %v1411 = vsel %vm1283, %v1219, %v1347
      %v1412 = vsel %vm1284, %v1220, %v1348
      %v1413 = vsel %vm1285, %v1221, %v1349
      %v1414 = vsel %vm1286, %v1222, %v1350
      %v1415 = vsel %vm1287, %v1223, %v1351
      %v1416 = vsel %vm1288, %v1224, %v1352
      %v1417 = vsel %vm1289, %v1225, %v1353
      %v1418 = vsel %vm1290, %v1226, %v1354
      %v1419 = vld [vmem:[%s5] sm:$0xff]
      %v1420 = vld [vmem:[%s5 + $0x8] sm:$0xff]
      %v1421 = vld [vmem:[%s5 + $0x10] sm:$0xff]
      %v1422 = vld [vmem:[%s5 + $0x18] sm:$0xff]
      %v1423 = vld [vmem:[%s5 + $0x20] sm:$0xff]
      %v1424 = vld [vmem:[%s5 + $0x28] sm:$0xff]
      %v1425 = vld [vmem:[%s5 + $0x30] sm:$0xff]
      %v1426 = vld [vmem:[%s5 + $0x38] sm:$0xff]
      %v1427 = vld [vmem:[%s5 + $0x40] sm:$0xff]
      %v1428 = vld [vmem:[%s5 + $0x48] sm:$0xff]
      %v1429 = vld [vmem:[%s5 + $0x50] sm:$0xff]
      %v1430 = vld [vmem:[%s5 + $0x58] sm:$0xff]
      %v1431 = vld [vmem:[%s5 + $0x60] sm:$0xff]
      %v1432 = vld [vmem:[%s5 + $0x68] sm:$0xff]
      %v1433 = vld [vmem:[%s5 + $0x70] sm:$0xff]
      %v1434 = vld [vmem:[%s5 + $0x78] sm:$0xff]
      %v1435 = vld [vmem:[%s5 + $0x80] sm:$0xff]
      %v1436 = vld [vmem:[%s5 + $0x88] sm:$0xff]
      %v1437 = vld [vmem:[%s5 + $0x90] sm:$0xff]
      %v1438 = vld [vmem:[%s5 + $0x98] sm:$0xff]
      %v1439 = vld [vmem:[%s5 + $0xa0] sm:$0xff]
      %v1440 = vld [vmem:[%s5 + $0xa8] sm:$0xff]
      %v1441 = vld [vmem:[%s5 + $0xb0] sm:$0xff]
      %v1442 = vld [vmem:[%s5 + $0xb8] sm:$0xff]
      %v1443 = vld [vmem:[%s5 + $0xc0] sm:$0xff]
      %v1444 = vld [vmem:[%s5 + $0xc8] sm:$0xff]
      %v1445 = vld [vmem:[%s5 + $0xd0] sm:$0xff]
      %v1446 = vld [vmem:[%s5 + $0xd8] sm:$0xff]
      %v1447 = vld [vmem:[%s5 + $0xe0] sm:$0xff]
      %v1448 = vld [vmem:[%s5 + $0xe8] sm:$0xff]
      %v1449 = vld [vmem:[%s5 + $0xf0] sm:$0xff]
      %v1450 = vld [vmem:[%s5 + $0xf8] sm:$0xff]
      %v1451 = vld [vmem:[%s5 + $0x100] sm:$0xff]
      %v1452 = vld [vmem:[%s5 + $0x108] sm:$0xff]
      %v1453 = vld [vmem:[%s5 + $0x110] sm:$0xff]
      %v1454 = vld [vmem:[%s5 + $0x118] sm:$0xff]
      %v1455 = vld [vmem:[%s5 + $0x120] sm:$0xff]
      %v1456 = vld [vmem:[%s5 + $0x128] sm:$0xff]
      %v1457 = vld [vmem:[%s5 + $0x130] sm:$0xff]
      %v1458 = vld [vmem:[%s5 + $0x138] sm:$0xff]
      %v1459 = vld [vmem:[%s5 + $0x140] sm:$0xff]
      %v1460 = vld [vmem:[%s5 + $0x148] sm:$0xff]
      %v1461 = vld [vmem:[%s5 + $0x150] sm:$0xff]
      %v1462 = vld [vmem:[%s5 + $0x158] sm:$0xff]
      %v1463 = vld [vmem:[%s5 + $0x160] sm:$0xff]
      %v1464 = vld [vmem:[%s5 + $0x168] sm:$0xff]
      %v1465 = vld [vmem:[%s5 + $0x170] sm:$0xff]
      %v1466 = vld [vmem:[%s5 + $0x178] sm:$0xff]
      %v1467 = vld [vmem:[%s5 + $0x180] sm:$0xff]
      %v1468 = vld [vmem:[%s5 + $0x188] sm:$0xff]
      %v1469 = vld [vmem:[%s5 + $0x190] sm:$0xff]
      %v1470 = vld [vmem:[%s5 + $0x198] sm:$0xff]
      %v1471 = vld [vmem:[%s5 + $0x1a0] sm:$0xff]
      %v1472 = vld [vmem:[%s5 + $0x1a8] sm:$0xff]
      %v1473 = vld [vmem:[%s5 + $0x1b0] sm:$0xff]
      %v1474 = vld [vmem:[%s5 + $0x1b8] sm:$0xff]
      %v1475 = vld [vmem:[%s5 + $0x1c0] sm:$0xff]
      %v1476 = vld [vmem:[%s5 + $0x1c8] sm:$0xff]
      %v1477 = vld [vmem:[%s5 + $0x1d0] sm:$0xff]
      %v1478 = vld [vmem:[%s5 + $0x1d8] sm:$0xff]
      %v1479 = vld [vmem:[%s5 + $0x1e0] sm:$0xff]
      %v1480 = vld [vmem:[%s5 + $0x1e8] sm:$0xff]
      %v1481 = vld [vmem:[%s5 + $0x1f0] sm:$0xff]
      %v1482 = vld [vmem:[%s5 + $0x1f8] sm:$0xff]
      %v1483 = vld [vmem:[%s6] sm:$0x1]
      %v1485 = vlaneseq
      %v1486 = vshrl.u32 %v1485, 7
      %v1487 = vsub.s32 0, %v1486
      %v1488 = vrot.slane %v1483, %v1487
      %1490 = vmatprep.subr.mxu0 0.0
      %1491 = vmatpush1.msra.mxu0 %v1419
      %1492 = vmatprep.subr.mxu0 0.0
      %1493 = vmatpush1.msra.mxu0 %v1420
      %1494 = vmatprep.subr.mxu0 0.0
      %1495 = vmatpush1.msra.mxu0 %v1421
      %1496 = vmatprep.subr.mxu0 0.0
      %1497 = vmatpush1.msra.mxu0 %v1422
      %1498 = vmatprep.subr.mxu0 0.0
      %1499 = vmatpush1.msra.mxu0 %v1423
      %1500 = vmatprep.subr.mxu0 0.0
      %1501 = vmatpush1.msra.mxu0 %v1424
      %1502 = vmatprep.subr.mxu0 0.0
      %1503 = vmatpush1.msra.mxu0 %v1425
      %1504 = vmatprep.subr.mxu0 0.0
      %1505 = vmatpush1.msra.mxu0 %v1426
      %1506 = vmatprep.subr.mxu0 0.0
      %1507 = vmatpush1.msra.mxu0 %v1427
      %1508 = vmatprep.subr.mxu0 0.0
      %1509 = vmatpush1.msra.mxu0 %v1428
      %1510 = vmatprep.subr.mxu0 0.0
      %1511 = vmatpush1.msra.mxu0 %v1429
      %1512 = vmatprep.subr.mxu0 0.0
      %1513 = vmatpush1.msra.mxu0 %v1430
      %1514 = vmatprep.subr.mxu0 0.0
      %1515 = vmatpush1.msra.mxu0 %v1431
      %1516 = vmatprep.subr.mxu0 0.0
      %1517 = vmatpush1.msra.mxu0 %v1432
      %1518 = vmatprep.subr.mxu0 0.0
      %1519 = vmatpush1.msra.mxu0 %v1433
      %1520 = vmatprep.subr.mxu0 0.0
      %1521 = vmatpush1.msra.mxu0 %v1434
      %1522 = vmatprep.subr.mxu0 0.0
      %1523 = vmatpush1.msra.mxu0 %v1435
      %1524 = vmatprep.subr.mxu0 0.0
      %1525 = vmatpush1.msra.mxu0 %v1436
      %1526 = vmatprep.subr.mxu0 0.0
      %1527 = vmatpush1.msra.mxu0 %v1437
      %1528 = vmatprep.subr.mxu0 0.0
      %1529 = vmatpush1.msra.mxu0 %v1438
      %1530 = vmatprep.subr.mxu0 0.0
      %1531 = vmatpush1.msra.mxu0 %v1439
      %1532 = vmatprep.subr.mxu0 0.0
      %1533 = vmatpush1.msra.mxu0 %v1440
      %1534 = vmatprep.subr.mxu0 0.0
      %1535 = vmatpush1.msra.mxu0 %v1441
      %1536 = vmatprep.subr.mxu0 0.0
      %1537 = vmatpush1.msra.mxu0 %v1442
      %1538 = vmatprep.subr.mxu0 0.0
      %1539 = vmatpush1.msra.mxu0 %v1443
      %1540 = vmatprep.subr.mxu0 0.0
      %1541 = vmatpush1.msra.mxu0 %v1444
      %1542 = vmatprep.subr.mxu0 0.0
      %1543 = vmatpush1.msra.mxu0 %v1445
      %1544 = vmatprep.subr.mxu0 0.0
      %1545 = vmatpush1.msra.mxu0 %v1446
      %1546 = vmatprep.subr.mxu0 0.0
      %1547 = vmatpush1.msra.mxu0 %v1447
      %1548 = vmatprep.subr.mxu0 0.0
      %1549 = vmatpush1.msra.mxu0 %v1448
      %1550 = vmatprep.subr.mxu0 0.0
      %1551 = vmatpush1.msra.mxu0 %v1449
      %1552 = vmatprep.subr.mxu0 0.0
      %1553 = vmatpush1.msra.mxu0 %v1450
      %1554 = vmatprep.mubr.f32.mxu0 %v1356
      %1555 = vmatmul.mubr.f32.gmra.mrb[0].mxu0 %v1355
      %v1556 = vpop.f32.mrb[0].mxu0
      %v1557 = vadd.f32 %v1488, %v1556
      %v1558 = vpop.f32.mrb[0].mxu0
      %1559 = vmatprep.mubr.f32.mxu0 %v1360
      %1560 = vmatmul.mubr.f32.gmra.mrb[0].mxu0 %v1359
      %v1561 = vpop.f32.mrb[0].mxu0
      %v1562 = vadd.f32 %v1488, %v1561
      %v1563 = vpop.f32.mrb[0].mxu0
      %1564 = vmatprep.mubr.f32.mxu0 %v1364
      %1565 = vmatmul.mubr.f32.gmra.mrb[0].mxu0 %v1363
      %v1566 = vpop.f32.mrb[0].mxu0
      %v1567 = vadd.f32 %v1488, %v1566
      %v1568 = vpop.f32.mrb[0].mxu0
      %1569 = vmatprep.mubr.f32.mxu0 %v1368
      %1570 = vmatmul.mubr.f32.gmra.mrb[0].mxu0 %v1367
      %v1571 = vpop.f32.mrb[0].mxu0
      %v1572 = vadd.f32 %v1488, %v1571
      %v1573 = vpop.f32.mrb[0].mxu0
      %1574 = vmatprep.mubr.f32.mxu0 %v1372
      %1575 = vmatmul.mubr.f32.gmra.mrb[0].mxu0 %v1371
      %v1576 = vpop.f32.mrb[0].mxu0
      %v1577 = vadd.f32 %v1488, %v1576
      %v1578 = vpop.f32.mrb[0].mxu0
      %1579 = vmatprep.mubr.f32.mxu0 %v1376
      %1580 = vmatmul.mubr.f32.gmra.mrb[0].mxu0 %v1375
      %v1581 = vpop.f32.mrb[0].mxu0
      %v1582 = vadd.f32 %v1488, %v1581
      %v1583 = vpop.f32.mrb[0].mxu0
      %1584 = vmatprep.mubr.f32.mxu0 %v1380
      %1585 = vmatmul.mubr.f32.gmra.mrb[0].mxu0 %v1379
      %v1586 = vpop.f32.mrb[0].mxu0
      %v1587 = vadd.f32 %v1488, %v1586
      %v1588 = vpop.f32.mrb[0].mxu0
      %1589 = vmatprep.mubr.f32.mxu0 %v1384
      %1590 = vmatmul.mubr.f32.gmra.mrb[0].mxu0 %v1383
      %v1591 = vpop.f32.mrb[0].mxu0
      %v1592 = vadd.f32 %v1488, %v1591
      %v1593 = vpop.f32.mrb[0].mxu0
      %1594 = vmatprep.mubr.f32.mxu0 %v1388
      %1595 = vmatmul.mubr.f32.gmra.mrb[0].mxu0 %v1387
      %v1596 = vpop.f32.mrb[0].mxu0
      %v1597 = vadd.f32 %v1488, %v1596
      %v1598 = vpop.f32.mrb[0].mxu0
      %1599 = vmatprep.mubr.f32.mxu0 %v1392
      %1600 = vmatmul.mubr.f32.gmra.mrb[0].mxu0 %v1391
      %v1601 = vpop.f32.mrb[0].mxu0
      %v1602 = vadd.f32 %v1488, %v1601
      %v1603 = vpop.f32.mrb[0].mxu0
      %1604 = vmatprep.mubr.f32.mxu0 %v1396
      %1605 = vmatmul.mubr.f32.gmra.mrb[0].mxu0 %v1395
      %v1606 = vpop.f32.mrb[0].mxu0
      %v1607 = vadd.f32 %v1488, %v1606
      %v1608 = vpop.f32.mrb[0].mxu0
      %1609 = vmatprep.mubr.f32.mxu0 %v1400
      %1610 = vmatmul.mubr.f32.gmra.mrb[0].mxu0 %v1399
      %v1611 = vpop.f32.mrb[0].mxu0
      %v1612 = vadd.f32 %v1488, %v1611
      %v1613 = vpop.f32.mrb[0].mxu0
      %1614 = vmatprep.mubr.f32.mxu0 %v1404
      %1615 = vmatmul.mubr.f32.gmra.mrb[0].mxu0 %v1403
      %v1616 = vpop.f32.mrb[0].mxu0
      %v1617 = vadd.f32 %v1488, %v1616
      %v1618 = vpop.f32.mrb[0].mxu0
      %1619 = vmatprep.mubr.f32.mxu0 %v1408
      %1620 = vmatmul.mubr.f32.gmra.mrb[0].mxu0 %v1407
      %v1621 = vpop.f32.mrb[0].mxu0
      %v1622 = vadd.f32 %v1488, %v1621
      %v1623 = vpop.f32.mrb[0].mxu0
      %1624 = vmatprep.mubr.f32.mxu0 %v1412
      %1625 = vmatmul.mubr.f32.gmra.mrb[0].mxu0 %v1411
      %v1626 = vpop.f32.mrb[0].mxu0
      %v1627 = vadd.f32 %v1488, %v1626
      %v1628 = vpop.f32.mrb[0].mxu0
      %1629 = vmatprep.mubr.f32.mxu0 %v1416
      %1630 = vmatmul.mubr.f32.gmra.mrb[0].mxu0 %v1415
      %v1631 = vpop.f32.mrb[0].mxu0
      %v1632 = vadd.f32 %v1488, %v1631
      %v1633 = vpop.f32.mrb[0].mxu0
      %1634 = vdwg.mxu0
      %1635 = vmatprep.subr.mxu0 0.0
      %1636 = vmatpush1.msra.mxu0 %v1451
      %1637 = vmatprep.subr.mxu0 0.0
      %1638 = vmatpush1.msra.mxu0 %v1452
      %1639 = vmatprep.subr.mxu0 0.0
      %1640 = vmatpush1.msra.mxu0 %v1453
      %1641 = vmatprep.subr.mxu0 0.0
      %1642 = vmatpush1.msra.mxu0 %v1454
      %1643 = vmatprep.subr.mxu0 0.0
      %1644 = vmatpush1.msra.mxu0 %v1455
      %1645 = vmatprep.subr.mxu0 0.0
      %1646 = vmatpush1.msra.mxu0 %v1456
      %1647 = vmatprep.subr.mxu0 0.0
      %1648 = vmatpush1.msra.mxu0 %v1457
      %1649 = vmatprep.subr.mxu0 0.0
      %1650 = vmatpush1.msra.mxu0 %v1458
      %1651 = vmatprep.subr.mxu0 0.0
      %1652 = vmatpush1.msra.mxu0 %v1459
      %1653 = vmatprep.subr.mxu0 0.0
      %1654 = vmatpush1.msra.mxu0 %v1460
      %1655 = vmatprep.subr.mxu0 0.0
      %1656 = vmatpush1.msra.mxu0 %v1461
      %1657 = vmatprep.subr.mxu0 0.0
      %1658 = vmatpush1.msra.mxu0 %v1462
      %1659 = vmatprep.subr.mxu0 0.0
      %1660 = vmatpush1.msra.mxu0 %v1463
      %1661 = vmatprep.subr.mxu0 0.0
      %1662 = vmatpush1.msra.mxu0 %v1464
      %1663 = vmatprep.subr.mxu0 0.0
      %1664 = vmatpush1.msra.mxu0 %v1465
      %1665 = vmatprep.subr.mxu0 0.0
      %1666 = vmatpush1.msra.mxu0 %v1466
      %1667 = vmatprep.subr.mxu0 0.0
      %1668 = vmatpush1.msra.mxu0 %v1467
      %1669 = vmatprep.subr.mxu0 0.0
      %1670 = vmatpush1.msra.mxu0 %v1468
      %1671 = vmatprep.subr.mxu0 0.0
      %1672 = vmatpush1.msra.mxu0 %v1469
      %1673 = vmatprep.subr.mxu0 0.0
      %1674 = vmatpush1.msra.mxu0 %v1470
      %1675 = vmatprep.subr.mxu0 0.0
      %1676 = vmatpush1.msra.mxu0 %v1471
      %1677 = vmatprep.subr.mxu0 0.0
      %1678 = vmatpush1.msra.mxu0 %v1472
      %1679 = vmatprep.subr.mxu0 0.0
      %1680 = vmatpush1.msra.mxu0 %v1473
      %1681 = vmatprep.subr.mxu0 0.0
      %1682 = vmatpush1.msra.mxu0 %v1474
      %1683 = vmatprep.subr.mxu0 0.0
      %1684 = vmatpush1.msra.mxu0 %v1475
      %1685 = vmatprep.subr.mxu0 0.0
      %1686 = vmatpush1.msra.mxu0 %v1476
      %1687 = vmatprep.subr.mxu0 0.0
      %1688 = vmatpush1.msra.mxu0 %v1477
      %1689 = vmatprep.subr.mxu0 0.0
      %1690 = vmatpush1.msra.mxu0 %v1478
      %1691 = vmatprep.subr.mxu0 0.0
      %1692 = vmatpush1.msra.mxu0 %v1479
      %1693 = vmatprep.subr.mxu0 0.0
      %1694 = vmatpush1.msra.mxu0 %v1480
      %1695 = vmatprep.subr.mxu0 0.0
      %1696 = vmatpush1.msra.mxu0 %v1481
      %1697 = vmatprep.subr.mxu0 0.0
      %1698 = vmatpush1.msra.mxu0 %v1482
      %1699 = vmatprep.mubr.f32.mxu0 %v1358
      %1700 = vmatmul.mubr.f32.gmra.mrb[0].mxu0 %v1357
      %v1701 = vpop.f32.mrb[0].mxu0
      %v1702 = vadd.f32 %v1557, %v1701
      %v1703 = vpop.f32.mrb[0].mxu0
      %1704 = vmatprep.mubr.f32.mxu0 %v1362
      %1705 = vmatmul.mubr.f32.gmra.mrb[0].mxu0 %v1361
      %v1706 = vpop.f32.mrb[0].mxu0
      %v1707 = vadd.f32 %v1562, %v1706
      %v1708 = vpop.f32.mrb[0].mxu0
      %1709 = vmatprep.mubr.f32.mxu0 %v1366
      %1710 = vmatmul.mubr.f32.gmra.mrb[0].mxu0 %v1365
      %v1711 = vpop.f32.mrb[0].mxu0
      %v1712 = vadd.f32 %v1567, %v1711
      %v1713 = vpop.f32.mrb[0].mxu0
      %1714 = vmatprep.mubr.f32.mxu0 %v1370
      %1715 = vmatmul.mubr.f32.gmra.mrb[0].mxu0 %v1369
      %v1716 = vpop.f32.mrb[0].mxu0
      %v1717 = vadd.f32 %v1572, %v1716
      %v1718 = vpop.f32.mrb[0].mxu0
      %1719 = vmatprep.mubr.f32.mxu0 %v1374
      %1720 = vmatmul.mubr.f32.gmra.mrb[0].mxu0 %v1373
      %v1721 = vpop.f32.mrb[0].mxu0
      %v1722 = vadd.f32 %v1577, %v1721
      %v1723 = vpop.f32.mrb[0].mxu0
      %1724 = vmatprep.mubr.f32.mxu0 %v1378
      %1725 = vmatmul.mubr.f32.gmra.mrb[0].mxu0 %v1377
      %v1726 = vpop.f32.mrb[0].mxu0
      %v1727 = vadd.f32 %v1582, %v1726
      %v1728 = vpop.f32.mrb[0].mxu0
      %1729 = vmatprep.mubr.f32.mxu0 %v1382
      %1730 = vmatmul.mubr.f32.gmra.mrb[0].mxu0 %v1381
      %v1731 = vpop.f32.mrb[0].mxu0
      %v1732 = vadd.f32 %v1587, %v1731
      %v1733 = vpop.f32.mrb[0].mxu0
      %1734 = vmatprep.mubr.f32.mxu0 %v1386
      %1735 = vmatmul.mubr.f32.gmra.mrb[0].mxu0 %v1385
      %v1736 = vpop.f32.mrb[0].mxu0
      %v1737 = vadd.f32 %v1592, %v1736
      %v1738 = vpop.f32.mrb[0].mxu0
      %1739 = vmatprep.mubr.f32.mxu0 %v1390
      %1740 = vmatmul.mubr.f32.gmra.mrb[0].mxu0 %v1389
      %v1741 = vpop.f32.mrb[0].mxu0
      %v1742 = vadd.f32 %v1597, %v1741
      %v1743 = vpop.f32.mrb[0].mxu0
      %1744 = vmatprep.mubr.f32.mxu0 %v1394
      %1745 = vmatmul.mubr.f32.gmra.mrb[0].mxu0 %v1393
      %v1746 = vpop.f32.mrb[0].mxu0
      %v1747 = vadd.f32 %v1602, %v1746
      %v1748 = vpop.f32.mrb[0].mxu0
      %1749 = vmatprep.mubr.f32.mxu0 %v1398
      %1750 = vmatmul.mubr.f32.gmra.mrb[0].mxu0 %v1397
      %v1751 = vpop.f32.mrb[0].mxu0
      %v1752 = vadd.f32 %v1607, %v1751
      %v1753 = vpop.f32.mrb[0].mxu0
      %1754 = vmatprep.mubr.f32.mxu0 %v1402
      %1755 = vmatmul.mubr.f32.gmra.mrb[0].mxu0 %v1401
      %v1756 = vpop.f32.mrb[0].mxu0
      %v1757 = vadd.f32 %v1612, %v1756
      %v1758 = vpop.f32.mrb[0].mxu0
      %1759 = vmatprep.mubr.f32.mxu0 %v1406
      %1760 = vmatmul.mubr.f32.gmra.mrb[0].mxu0 %v1405
      %v1761 = vpop.f32.mrb[0].mxu0
      %v1762 = vadd.f32 %v1617, %v1761
      %v1763 = vpop.f32.mrb[0].mxu0
      %1764 = vmatprep.mubr.f32.mxu0 %v1410
      %1765 = vmatmul.mubr.f32.gmra.mrb[0].mxu0 %v1409
      %v1766 = vpop.f32.mrb[0].mxu0
      %v1767 = vadd.f32 %v1622, %v1766
      %v1768 = vpop.f32.mrb[0].mxu0
      %1769 = vmatprep.mubr.f32.mxu0 %v1414
      %1770 = vmatmul.mubr.f32.gmra.mrb[0].mxu0 %v1413
      %v1771 = vpop.f32.mrb[0].mxu0
      %v1772 = vadd.f32 %v1627, %v1771
      %v1773 = vpop.f32.mrb[0].mxu0
      %1774 = vmatprep.mubr.f32.mxu0 %v1418
      %1775 = vmatmul.mubr.f32.gmra.mrb[0].mxu0 %v1417
      %v1776 = vpop.f32.mrb[0].mxu0
      %v1777 = vadd.f32 %v1632, %v1776
      %v1778 = vpop.f32.mrb[0].mxu0
      %1779 = vdwg.mxu0
      %1780 = vst [vmem:[%s302] sm:$0xff] %v1702
      %1781 = vst [vmem:[%s302 + $0x8] sm:$0xff] %v1707
      %1782 = vst [vmem:[%s302 + $0x10] sm:$0xff] %v1712
      %1783 = vst [vmem:[%s302 + $0x18] sm:$0xff] %v1717
      %1784 = vst [vmem:[%s302 + $0x20] sm:$0xff] %v1722
      %1785 = vst [vmem:[%s302 + $0x28] sm:$0xff] %v1727
      %1786 = vst [vmem:[%s302 + $0x30] sm:$0xff] %v1732
      %1787 = vst [vmem:[%s302 + $0x38] sm:$0xff] %v1737
      %1788 = vst [vmem:[%s302 + $0x40] sm:$0xff] %v1742
      %1789 = vst [vmem:[%s302 + $0x48] sm:$0xff] %v1747
      %1790 = vst [vmem:[%s302 + $0x50] sm:$0xff] %v1752
      %1791 = vst [vmem:[%s302 + $0x58] sm:$0xff] %v1757
      %1792 = vst [vmem:[%s302 + $0x60] sm:$0xff] %v1762
      %1793 = vst [vmem:[%s302 + $0x68] sm:$0xff] %v1767
      %1794 = vst [vmem:[%s302 + $0x70] sm:$0xff] %v1772
      %1795 = vst [vmem:[%s302 + $0x78] sm:$0xff] %v1777
      %s1796 = smul.u32 16, %s18
      %p1797 = scmp.lt.s32.totalorder %s1796, 31
      %s1798 = scalar_select %p1797, %s1796, 31
      %s1799 = smul.addr %s1798, 8
      %s1800 = scalar_lea.vmem %s7, %s1799
      // Predicated region
      $region49: #{base_generator_forward.1} parent=47 // pred_check
        %p1801 = pneg %p193
      $region50: #{base_generator_forward.1} parent=47 // pred_check_branch
        %1803 = sbr.rel (%p1801) target = $region52
      $region51: #{base_generator_forward.1} parent=47 // pred_region
        %s1804 = smul.u32 16, %s18
      $region52: #{base_generator_forward.1} parent=47 // pred_fallthru
        _
    $region48: #{base_generator_forward.1} parent=5 // pred_fallthru
      _
    %p1805 = scmp.le.s32.totalorder 2, %s13
    // Predicated region
    $region53: #{base_generator_forward.1} parent=5 // pred_check
      %p1806 = pneg %p1805
    $region54: #{base_generator_forward.1} parent=5 // pred_check_branch
      %1808 = sbr.rel (%p1806) target = $region56
    $region55: #{base_generator_forward.1} parent=5 // pred_region
      %s1809 = ssub.s32 %s13, 2
      // Predicated region
      $region57: #{base_generator_forward.1} parent=55 // pred_check
        %p1810 = pneg %p199
      $region58: #{base_generator_forward.1} parent=55 // pred_check_branch
        %1812 = sbr.rel (%p1810) target = $region60
      $region59: #{base_generator_forward.1} parent=55 // pred_region
        %s1813 = smul.u32 16, %s19
        %p1814 = scmp.lt.s32.totalorder %s1813, 31
        %s1815 = scalar_select %p1814, %s1813, 31
        %s1816 = smul.addr %s1815, 8
        %s1817 = scalar_lea.vmem %s7, %s1816
      $region60: #{base_generator_forward.1} parent=55 // pred_fallthru
        _
    $region56: #{base_generator_forward.1} parent=5 // pred_fallthru
      _
  $region6: #{base_generator_forward.1} parent=0 // loop_footer
    %s17 = sadd.s32 1, %s13
  $region7: #{base_generator_forward.1} parent=0 // loop_footer_branch
    %12 = sbr.rel target = $region3
  $region8: #{base_generator_forward.1} parent=0 // loop_exit
    _

</llo_original>
